<compile_context>
chip_gen: v6e
topology: v6e:2x2x1
jax: 0.10.0
libtpu: 0.0.40
codegen_flags: <defaults>
</compile_context>

<pallas_src>
import math
import functools

import jax
import jax.numpy as jnp
import numpy as np
from jax.experimental import pallas as pl
from jax.experimental.pallas import tpu as pltpu


# ------------------------------------------------------------------ kernel ---
def _caa_block_kernel(q_ref, kv_ref,
                      wq_ref, bq_ref,
                      wkv_ref, bkv_ref,
                      wo_ref, bo_ref,
                      o_ref,
                      ctx_ref,
                      *, batch: int, lq: int, lkv: int, n_head: int, d_k: int):
    """Whole problem in one invocation.

    Shapes seen by the kernel (wrapper flattens the batch dim into rows):
      q_ref  : (B*Lq,  D)        kv_ref : (B*Lkv, D)
      wq_ref : (D, D)  bq_ref : (1, D)     -- 1/sqrt(d_k) already folded in
      wkv_ref: (D, 2D) bkv_ref: (1, 2D)    -- [Wk | Wv] concatenated (lane-dense)
      wo_ref : (D, D)  bo_ref : (1, D)
      o_ref  : (B*Lq,  D)
      ctx_ref: (B*Lq,  D) f32 VMEM scratch (per-head context written at lane offsets)
    """
    D = n_head * d_k

    # Fused lane-dense projections: two full-width MXU matmuls, f32 accumulation.
    Q = jnp.dot(q_ref[...], wq_ref[...],
                preferred_element_type=jnp.float32) + bq_ref[...]          # (B*Lq, D)
    KV = jnp.dot(kv_ref[...], wkv_ref[...],
                 preferred_element_type=jnp.float32) + bkv_ref[...]        # (B*Lkv, 2D)

    # Per-head attention, batched over B.  d_k=8 scores matmuls are inherent to the
    # head structure; the Python loop is unrolled at trace time (n_head=4).
    # TODO(synk): atten_mask path (masked_fill(mask==0, -1e9)) not implemented; the
    #             reference forward is exercised with atten_mask=None.
    for h in range(n_head):
        lo = h * d_k
        Qh = Q[:, lo:lo + d_k].reshape(batch, lq, d_k)                     # (B, Lq,  d_k)
        Kh = KV[:, lo:lo + d_k].reshape(batch, lkv, d_k)                   # (B, Lkv, d_k)
        Vh = KV[:, D + lo:D + lo + d_k].reshape(batch, lkv, d_k)           # (B, Lkv, d_k)

        # Scale already folded into Wq/bq.  The einsum contracts the last dim of
        # both operands (implied K transpose); negligible at Lkv=8.
        s = jnp.einsum('bqd,bkd->bqk', Qh, Kh,
                       preferred_element_type=jnp.float32)                 # (B, Lq, Lkv)
        m = jnp.max(s, axis=-1, keepdims=True)
        e = jnp.exp(s - m)
        denom = jnp.sum(e, axis=-1, keepdims=True)
        # Exact reciprocal (approx=True would be the cheap EUP path but adds
        # ~2^-12 rel error, outside the 1e-5 reference tolerance).
        p = e * pl.reciprocal(denom, approx=False)
        ctx_h = jnp.einsum('bqk,bkd->bqd', p, Vh,
                           preferred_element_type=jnp.float32)             # (B, Lq, d_k)

        # Re-assemble concat(heads) by writing into the scratch at lane offset.
        ctx_ref[:, lo:lo + d_k] = ctx_h.reshape(batch * lq, d_k)

    # Single lane-dense output projection.
    out = jnp.dot(ctx_ref[...], wo_ref[...],
                  preferred_element_type=jnp.float32) + bo_ref[...]        # (B*Lq, D)
    o_ref[...] = out.astype(o_ref.dtype)


# ----------------------------------------------------------------- wrapper ---
def caa_layer_pallas(q, kv, params, *, n_head: int):
    """Run one CAA_Block_Layer (cross-attention). q:(B,Lq,D), kv:(B,Lkv,D)."""
    B, Lq, D = q.shape
    _, Lkv, _ = kv.shape
    assert D % n_head == 0
    d_k = D // n_head
    scale = 1.0 / math.sqrt(d_k)

    wq, bq, wk, bk, wv, bv, wo, bo = params

    # Wrapper-side (one-time) weight prep: keep weights lane-dense (D,D)/(D,2D),
    # fold the 1/sqrt(d_k) scale into the Q projection, fuse K/V projections.
    wq_s = wq * scale                              # (D, D)
    bq_s = bq * scale                              # (1, D)
    wkv = jnp.concatenate([wk, wv], axis=1)        # (D, 2D)
    bkv = jnp.concatenate([bk, bv], axis=1)        # (1, 2D)

    # Flatten batch into rows (free, contiguous) so the kernel runs once for all B.
    q2 = q.reshape(B * Lq, D)
    kv2 = kv.reshape(B * Lkv, D)

    kernel = functools.partial(_caa_block_kernel,
                               batch=B, lq=Lq, lkv=Lkv, n_head=n_head, d_k=d_k)

    vmem_spec = pl.BlockSpec(memory_space=pltpu.MemorySpace.VMEM)

    # TODO(synk): if D / Lq / Lkv grow to production sizes, add a kv-length grid axis
    #             with online-softmax accumulation and Lq tiling (and CORE_PARALLEL /
    #             a batch grid axis on v7x to engage the second TensorCore).
    out2 = pl.pallas_call(
        kernel,
        out_shape=jax.ShapeDtypeStruct((B * Lq, D), q.dtype),
        in_specs=[vmem_spec] * 8,
        out_specs=vmem_spec,
        scratch_shapes=[pltpu.VMEM((B * Lq, D), jnp.float32)],
    )(q2, kv2, wq_s, bq_s, wkv, bkv, wo, bo)

    return out2.reshape(B, Lq, D)


def caa_block_pallas(q, kv, layer_params, *, n_head: int):
    """CAA_Block.forward: every layer consumes the ORIGINAL (q, kv) and only the
    last layer's output is returned (verified against the PyTorch loop), so earlier
    layers are dead compute -> launch only the final layer's kernel."""
    assert len(layer_params) >= 1
    return caa_layer_pallas(q, kv, layer_params[-1], n_head=n_head)


# ------------------------------------------------------------- param setup ---
def init_layer_params(key, d_model):
    """Deterministic init mimicking nn.Linear (uniform +/- 1/sqrt(fan_in))."""
    bound = 1.0 / math.sqrt(d_model)
    keys = jax.random.split(key, 8)
    params = []
    for i in range(4):  # Wq, Wk, Wv, Wo (stored as (in, out))
        w = jax.random.uniform(keys[2 * i], (d_model, d_model),
                               jnp.float32, -bound, bound)
        b = jax.random.uniform(keys[2 * i + 1], (1, d_model),
                               jnp.float32, -bound, bound)
        params += [w, b]
    return tuple(params)


# --------------------------------------------------------------- reference ---
def caa_layer_ref(q, kv, params, *, n_head: int):
    wq, bq, wk, bk, wv, bv, wo, bo = params
    B, Lq, D = q.shape
    d_k = D // n_head
    Q = q @ wq + bq
    K = kv @ wk + bk
    V = kv @ wv + bv

    def split(x):  # (B, L, D) -> (B, h, L, d_k)
        return x.reshape(B, -1, n_head, d_k).transpose(0, 2, 1, 3)

    Qh, Kh, Vh = split(Q), split(K), split(V)
    s = jnp.einsum('bhqd,bhkd->bhqk', Qh, Kh) / math.sqrt(d_k)
    p = jax.nn.softmax(s, axis=-1)
    ctx = jnp.einsum('bhqk,bhkd->bhqd', p, Vh)
    ctx = ctx.transpose(0, 2, 1, 3).reshape(B, Lq, D)
    return ctx @ wo + bo


# -------------------------------------------------------------------- main ---
if __name__ == "__main__":
    # Small shapes consistent with the module's forward.
    B, Lq, Lkv, D = 2, 8, 8, 32
    n_head, nlayers = 4, 2

    key = jax.random.PRNGKey(0)
    kq, kkv, kp = jax.random.split(key, 3)
    q = jax.random.normal(kq, (B, Lq, D), jnp.float32)
    kv = jax.random.normal(kkv, (B, Lkv, D), jnp.float32)

    layer_params = [init_layer_params(k, D) for k in jax.random.split(kp, nlayers)]

    out = caa_block_pallas(q, kv, layer_params, n_head=n_head)
    out = jax.block_until_ready(out)

    # Pure-JAX reference (last layer only, matching CAA_Block semantics).
    ref = caa_layer_ref(q, kv, layer_params[-1], n_head=n_head)
    np.testing.assert_allclose(np.asarray(out), np.asarray(ref), rtol=1e-5, atol=1e-5)

    print("KERNEL_OK")
</pallas_src>

<mosaic_0001>
module attributes {stable_mosaic.version = 11 : i64} {
  func.func @_caa_block_kernel(%arg0: memref<16x32xf32, #tpu.memory_space<vmem>>, %arg1: memref<16x32xf32, #tpu.memory_space<vmem>>, %arg2: memref<32x32xf32, #tpu.memory_space<vmem>>, %arg3: memref<1x32xf32, #tpu.memory_space<vmem>>, %arg4: memref<32x64xf32, #tpu.memory_space<vmem>>, %arg5: memref<1x64xf32, #tpu.memory_space<vmem>>, %arg6: memref<32x32xf32, #tpu.memory_space<vmem>>, %arg7: memref<1x32xf32, #tpu.memory_space<vmem>>, %arg8: memref<16x32xf32, #tpu.memory_space<vmem>>, %arg9: memref<16x32xf32, #tpu.memory_space<vmem>>) attributes {dimension_semantics = [], scalar_prefetch = 0 : i64, scratch_operands = 1 : i64, tpu.core_type = #tpu.core_type<tc>} {
    %c0 = arith.constant 0 : index
    %c0_0 = arith.constant 0 : index
    %0 = vector.load %arg0[%c0, %c0_0] : memref<16x32xf32, #tpu.memory_space<vmem>>, vector<16x32xf32>
    %c0_1 = arith.constant 0 : index
    %c0_2 = arith.constant 0 : index
    %1 = vector.load %arg2[%c0_1, %c0_2] : memref<32x32xf32, #tpu.memory_space<vmem>>, vector<32x32xf32>
    %cst = arith.constant dense<0.000000e+00> : vector<16x32xf32>
    %2 = tpu.matmul %0, %1, %cst {dimension_numbers = #tpu.dot_dimension_numbers<[1], [0], [0], [1], [0, 0, 1, 1], [], []>} : vector<16x32xf32>, vector<32x32xf32>, vector<16x32xf32> -> vector<16x32xf32>
    %c0_3 = arith.constant 0 : index
    %c0_4 = arith.constant 0 : index
    %3 = vector.load %arg3[%c0_3, %c0_4] : memref<1x32xf32, #tpu.memory_space<vmem>>, vector<1x32xf32>
    %4 = vector.broadcast %3 : vector<1x32xf32> to vector<16x32xf32>
    %5 = arith.addf %2, %4 : vector<16x32xf32>
    %c0_5 = arith.constant 0 : index
    %c0_6 = arith.constant 0 : index
    %6 = vector.load %arg1[%c0_5, %c0_6] : memref<16x32xf32, #tpu.memory_space<vmem>>, vector<16x32xf32>
    %c0_7 = arith.constant 0 : index
    %c0_8 = arith.constant 0 : index
    %7 = vector.load %arg4[%c0_7, %c0_8] : memref<32x64xf32, #tpu.memory_space<vmem>>, vector<32x64xf32>
    %cst_9 = arith.constant dense<0.000000e+00> : vector<16x64xf32>
    %8 = tpu.matmul %6, %7, %cst_9 {dimension_numbers = #tpu.dot_dimension_numbers<[1], [0], [0], [1], [0, 0, 1, 1], [], []>} : vector<16x32xf32>, vector<32x64xf32>, vector<16x64xf32> -> vector<16x64xf32>
    %c0_10 = arith.constant 0 : index
    %c0_11 = arith.constant 0 : index
    %9 = vector.load %arg5[%c0_10, %c0_11] : memref<1x64xf32, #tpu.memory_space<vmem>>, vector<1x64xf32>
    %10 = vector.broadcast %9 : vector<1x64xf32> to vector<16x64xf32>
    %11 = arith.addf %8, %10 : vector<16x64xf32>
    %12 = vector.extract_strided_slice %5 {offsets = [0, 0], sizes = [16, 8], strides = [1, 1]} : vector<16x32xf32> to vector<16x8xf32>
    %13 = vector.shape_cast %12 : vector<16x8xf32> to vector<2x8x8xf32>
    %14 = vector.extract_strided_slice %11 {offsets = [0, 0], sizes = [16, 8], strides = [1, 1]} : vector<16x64xf32> to vector<16x8xf32>
    %15 = vector.shape_cast %14 : vector<16x8xf32> to vector<2x8x8xf32>
    %16 = vector.extract_strided_slice %11 {offsets = [0, 32], sizes = [16, 8], strides = [1, 1]} : vector<16x64xf32> to vector<16x8xf32>
    %17 = vector.shape_cast %16 : vector<16x8xf32> to vector<2x8x8xf32>
    "tpu.trace_start"() <{level = 10 : i32, message = "bqd,bkd->bqk"}> : () -> ()
    %cst_12 = arith.constant dense<0.000000e+00> : vector<2x8x8xf32>
    %18 = tpu.matmul %13, %15, %cst_12 {dimension_numbers = #tpu.dot_dimension_numbers<[2], [2], [1], [1], [0, 0, 0, 1, 1, 1], [0], [0]>} : vector<2x8x8xf32>, vector<2x8x8xf32>, vector<2x8x8xf32> -> vector<2x8x8xf32>
    "tpu.trace_stop"() : () -> ()
    %cst_13 = arith.constant dense<0xFF800000> : vector<2x8xf32>
    %19 = vector.multi_reduction <maximumf>, %18, %cst_13 [2] : vector<2x8x8xf32> to vector<2x8xf32>
    %20 = vector.shape_cast %19 : vector<2x8xf32> to vector<2x8x1xf32>
    %21 = vector.broadcast %20 : vector<2x8x1xf32> to vector<2x8x8xf32>
    %22 = arith.subf %18, %21 : vector<2x8x8xf32>
    %23 = math.exp %22 : vector<2x8x8xf32>
    %cst_14 = arith.constant dense<0.000000e+00> : vector<2x8xf32>
    %24 = vector.multi_reduction <add>, %23, %cst_14 [2] : vector<2x8x8xf32> to vector<2x8xf32>
    %25 = vector.shape_cast %24 : vector<2x8xf32> to vector<2x8x1xf32>
    %26 = tpu.reciprocal %25 : vector<2x8x1xf32> -> vector<2x8x1xf32>
    %27 = vector.broadcast %26 : vector<2x8x1xf32> to vector<2x8x8xf32>
    %28 = arith.mulf %23, %27 : vector<2x8x8xf32>
    "tpu.trace_start"() <{level = 10 : i32, message = "bqk,bkd->bqd"}> : () -> ()
    %cst_15 = arith.constant dense<0.000000e+00> : vector<2x8x8xf32>
    %29 = tpu.matmul %28, %17, %cst_15 {dimension_numbers = #tpu.dot_dimension_numbers<[2], [1], [1], [2], [0, 0, 0, 1, 1, 2], [0], [0]>} : vector<2x8x8xf32>, vector<2x8x8xf32>, vector<2x8x8xf32> -> vector<2x8x8xf32>
    "tpu.trace_stop"() : () -> ()
    %30 = vector.shape_cast %29 : vector<2x8x8xf32> to vector<16x8xf32>
    %c0_16 = arith.constant 0 : index
    %c0_17 = arith.constant 0 : index
    %31 = vector.load %arg9[%c0_16, %c0_17] : memref<16x32xf32, #tpu.memory_space<vmem>>, vector<16x8xf32>
    tpu.vector_store %arg9[%c0_16, %c0_17], %30 {strides = array<i32>} : memref<16x32xf32, #tpu.memory_space<vmem>>, vector<16x8xf32>,
    %32 = vector.extract_strided_slice %5 {offsets = [0, 8], sizes = [16, 8], strides = [1, 1]} : vector<16x32xf32> to vector<16x8xf32>
    %33 = vector.shape_cast %32 : vector<16x8xf32> to vector<2x8x8xf32>
    %34 = vector.extract_strided_slice %11 {offsets = [0, 8], sizes = [16, 8], strides = [1, 1]} : vector<16x64xf32> to vector<16x8xf32>
    %35 = vector.shape_cast %34 : vector<16x8xf32> to vector<2x8x8xf32>
    %36 = vector.extract_strided_slice %11 {offsets = [0, 40], sizes = [16, 8], strides = [1, 1]} : vector<16x64xf32> to vector<16x8xf32>
    %37 = vector.shape_cast %36 : vector<16x8xf32> to vector<2x8x8xf32>
    "tpu.trace_start"() <{level = 10 : i32, message = "bqd,bkd->bqk"}> : () -> ()
    %cst_18 = arith.constant dense<0.000000e+00> : vector<2x8x8xf32>
    %38 = tpu.matmul %33, %35, %cst_18 {dimension_numbers = #tpu.dot_dimension_numbers<[2], [2], [1], [1], [0, 0, 0, 1, 1, 1], [0], [0]>} : vector<2x8x8xf32>, vector<2x8x8xf32>, vector<2x8x8xf32> -> vector<2x8x8xf32>
    "tpu.trace_stop"() : () -> ()
    %cst_19 = arith.constant dense<0xFF800000> : vector<2x8xf32>
    %39 = vector.multi_reduction <maximumf>, %38, %cst_19 [2] : vector<2x8x8xf32> to vector<2x8xf32>
    %40 = vector.shape_cast %39 : vector<2x8xf32> to vector<2x8x1xf32>
    %41 = vector.broadcast %40 : vector<2x8x1xf32> to vector<2x8x8xf32>
    %42 = arith.subf %38, %41 : vector<2x8x8xf32>
    %43 = math.exp %42 : vector<2x8x8xf32>
    %cst_20 = arith.constant dense<0.000000e+00> : vector<2x8xf32>
    %44 = vector.multi_reduction <add>, %43, %cst_20 [2] : vector<2x8x8xf32> to vector<2x8xf32>
    %45 = vector.shape_cast %44 : vector<2x8xf32> to vector<2x8x1xf32>
    %46 = tpu.reciprocal %45 : vector<2x8x1xf32> -> vector<2x8x1xf32>
    %47 = vector.broadcast %46 : vector<2x8x1xf32> to vector<2x8x8xf32>
    %48 = arith.mulf %43, %47 : vector<2x8x8xf32>
    "tpu.trace_start"() <{level = 10 : i32, message = "bqk,bkd->bqd"}> : () -> ()
    %cst_21 = arith.constant dense<0.000000e+00> : vector<2x8x8xf32>
    %49 = tpu.matmul %48, %37, %cst_21 {dimension_numbers = #tpu.dot_dimension_numbers<[2], [1], [1], [2], [0, 0, 0, 1, 1, 2], [0], [0]>} : vector<2x8x8xf32>, vector<2x8x8xf32>, vector<2x8x8xf32> -> vector<2x8x8xf32>
    "tpu.trace_stop"() : () -> ()
    %50 = vector.shape_cast %49 : vector<2x8x8xf32> to vector<16x8xf32>
    %c0_22 = arith.constant 0 : index
    %c8 = arith.constant 8 : index
    %51 = vector.load %arg9[%c0_22, %c8] : memref<16x32xf32, #tpu.memory_space<vmem>>, vector<16x8xf32>
    tpu.vector_store %arg9[%c0_22, %c8], %50 {strides = array<i32>} : memref<16x32xf32, #tpu.memory_space<vmem>>, vector<16x8xf32>,
    %52 = vector.extract_strided_slice %5 {offsets = [0, 16], sizes = [16, 8], strides = [1, 1]} : vector<16x32xf32> to vector<16x8xf32>
    %53 = vector.shape_cast %52 : vector<16x8xf32> to vector<2x8x8xf32>
    %54 = vector.extract_strided_slice %11 {offsets = [0, 16], sizes = [16, 8], strides = [1, 1]} : vector<16x64xf32> to vector<16x8xf32>
    %55 = vector.shape_cast %54 : vector<16x8xf32> to vector<2x8x8xf32>
    %56 = vector.extract_strided_slice %11 {offsets = [0, 48], sizes = [16, 8], strides = [1, 1]} : vector<16x64xf32> to vector<16x8xf32>
    %57 = vector.shape_cast %56 : vector<16x8xf32> to vector<2x8x8xf32>
    "tpu.trace_start"() <{level = 10 : i32, message = "bqd,bkd->bqk"}> : () -> ()
    %cst_23 = arith.constant dense<0.000000e+00> : vector<2x8x8xf32>
    %58 = tpu.matmul %53, %55, %cst_23 {dimension_numbers = #tpu.dot_dimension_numbers<[2], [2], [1], [1], [0, 0, 0, 1, 1, 1], [0], [0]>} : vector<2x8x8xf32>, vector<2x8x8xf32>, vector<2x8x8xf32> -> vector<2x8x8xf32>
    "tpu.trace_stop"() : () -> ()
    %cst_24 = arith.constant dense<0xFF800000> : vector<2x8xf32>
    %59 = vector.multi_reduction <maximumf>, %58, %cst_24 [2] : vector<2x8x8xf32> to vector<2x8xf32>
    %60 = vector.shape_cast %59 : vector<2x8xf32> to vector<2x8x1xf32>
    %61 = vector.broadcast %60 : vector<2x8x1xf32> to vector<2x8x8xf32>
    %62 = arith.subf %58, %61 : vector<2x8x8xf32>
    %63 = math.exp %62 : vector<2x8x8xf32>
    %cst_25 = arith.constant dense<0.000000e+00> : vector<2x8xf32>
    %64 = vector.multi_reduction <add>, %63, %cst_25 [2] : vector<2x8x8xf32> to vector<2x8xf32>
    %65 = vector.shape_cast %64 : vector<2x8xf32> to vector<2x8x1xf32>
    %66 = tpu.reciprocal %65 : vector<2x8x1xf32> -> vector<2x8x1xf32>
    %67 = vector.broadcast %66 : vector<2x8x1xf32> to vector<2x8x8xf32>
    %68 = arith.mulf %63, %67 : vector<2x8x8xf32>
    "tpu.trace_start"() <{level = 10 : i32, message = "bqk,bkd->bqd"}> : () -> ()
    %cst_26 = arith.constant dense<0.000000e+00> : vector<2x8x8xf32>
    %69 = tpu.matmul %68, %57, %cst_26 {dimension_numbers = #tpu.dot_dimension_numbers<[2], [1], [1], [2], [0, 0, 0, 1, 1, 2], [0], [0]>} : vector<2x8x8xf32>, vector<2x8x8xf32>, vector<2x8x8xf32> -> vector<2x8x8xf32>
    "tpu.trace_stop"() : () -> ()
    %70 = vector.shape_cast %69 : vector<2x8x8xf32> to vector<16x8xf32>
    %c0_27 = arith.constant 0 : index
    %c16 = arith.constant 16 : index
    %71 = vector.load %arg9[%c0_27, %c16] : memref<16x32xf32, #tpu.memory_space<vmem>>, vector<16x8xf32>
    tpu.vector_store %arg9[%c0_27, %c16], %70 {strides = array<i32>} : memref<16x32xf32, #tpu.memory_space<vmem>>, vector<16x8xf32>,
    %72 = vector.extract_strided_slice %5 {offsets = [0, 24], sizes = [16, 8], strides = [1, 1]} : vector<16x32xf32> to vector<16x8xf32>
    %73 = vector.shape_cast %72 : vector<16x8xf32> to vector<2x8x8xf32>
    %74 = vector.extract_strided_slice %11 {offsets = [0, 24], sizes = [16, 8], strides = [1, 1]} : vector<16x64xf32> to vector<16x8xf32>
    %75 = vector.shape_cast %74 : vector<16x8xf32> to vector<2x8x8xf32>
    %76 = vector.extract_strided_slice %11 {offsets = [0, 56], sizes = [16, 8], strides = [1, 1]} : vector<16x64xf32> to vector<16x8xf32>
    %77 = vector.shape_cast %76 : vector<16x8xf32> to vector<2x8x8xf32>
    "tpu.trace_start"() <{level = 10 : i32, message = "bqd,bkd->bqk"}> : () -> ()
    %cst_28 = arith.constant dense<0.000000e+00> : vector<2x8x8xf32>
    %78 = tpu.matmul %73, %75, %cst_28 {dimension_numbers = #tpu.dot_dimension_numbers<[2], [2], [1], [1], [0, 0, 0, 1, 1, 1], [0], [0]>} : vector<2x8x8xf32>, vector<2x8x8xf32>, vector<2x8x8xf32> -> vector<2x8x8xf32>
    "tpu.trace_stop"() : () -> ()
    %cst_29 = arith.constant dense<0xFF800000> : vector<2x8xf32>
    %79 = vector.multi_reduction <maximumf>, %78, %cst_29 [2] : vector<2x8x8xf32> to vector<2x8xf32>
    %80 = vector.shape_cast %79 : vector<2x8xf32> to vector<2x8x1xf32>
    %81 = vector.broadcast %80 : vector<2x8x1xf32> to vector<2x8x8xf32>
    %82 = arith.subf %78, %81 : vector<2x8x8xf32>
    %83 = math.exp %82 : vector<2x8x8xf32>
    %cst_30 = arith.constant dense<0.000000e+00> : vector<2x8xf32>
    %84 = vector.multi_reduction <add>, %83, %cst_30 [2] : vector<2x8x8xf32> to vector<2x8xf32>
    %85 = vector.shape_cast %84 : vector<2x8xf32> to vector<2x8x1xf32>
    %86 = tpu.reciprocal %85 : vector<2x8x1xf32> -> vector<2x8x1xf32>
    %87 = vector.broadcast %86 : vector<2x8x1xf32> to vector<2x8x8xf32>
    %88 = arith.mulf %83, %87 : vector<2x8x8xf32>
    "tpu.trace_start"() <{level = 10 : i32, message = "bqk,bkd->bqd"}> : () -> ()
    %cst_31 = arith.constant dense<0.000000e+00> : vector<2x8x8xf32>
    %89 = tpu.matmul %88, %77, %cst_31 {dimension_numbers = #tpu.dot_dimension_numbers<[2], [1], [1], [2], [0, 0, 0, 1, 1, 2], [0], [0]>} : vector<2x8x8xf32>, vector<2x8x8xf32>, vector<2x8x8xf32> -> vector<2x8x8xf32>
    "tpu.trace_stop"() : () -> ()
    %90 = vector.shape_cast %89 : vector<2x8x8xf32> to vector<16x8xf32>
    %c0_32 = arith.constant 0 : index
    %c24 = arith.constant 24 : index
    %91 = vector.load %arg9[%c0_32, %c24] : memref<16x32xf32, #tpu.memory_space<vmem>>, vector<16x8xf32>
    tpu.vector_store %arg9[%c0_32, %c24], %90 {strides = array<i32>} : memref<16x32xf32, #tpu.memory_space<vmem>>, vector<16x8xf32>,
    %c0_33 = arith.constant 0 : index
    %c0_34 = arith.constant 0 : index
    %92 = vector.load %arg9[%c0_33, %c0_34] : memref<16x32xf32, #tpu.memory_space<vmem>>, vector<16x32xf32>
    %c0_35 = arith.constant 0 : index
    %c0_36 = arith.constant 0 : index
    %93 = vector.load %arg6[%c0_35, %c0_36] : memref<32x32xf32, #tpu.memory_space<vmem>>, vector<32x32xf32>
    %cst_37 = arith.constant dense<0.000000e+00> : vector<16x32xf32>
    %94 = tpu.matmul %92, %93, %cst_37 {dimension_numbers = #tpu.dot_dimension_numbers<[1], [0], [0], [1], [0, 0, 1, 1], [], []>} : vector<16x32xf32>, vector<32x32xf32>, vector<16x32xf32> -> vector<16x32xf32>
    %c0_38 = arith.constant 0 : index
    %c0_39 = arith.constant 0 : index
    %95 = vector.load %arg7[%c0_38, %c0_39] : memref<1x32xf32, #tpu.memory_space<vmem>>, vector<1x32xf32>
    %96 = vector.broadcast %95 : vector<1x32xf32> to vector<16x32xf32>
    %97 = arith.addf %94, %96 : vector<16x32xf32>
    %c0_40 = arith.constant 0 : index
    %c0_41 = arith.constant 0 : index
    %98 = vector.load %arg8[%c0_40, %c0_41] : memref<16x32xf32, #tpu.memory_space<vmem>>, vector<16x32xf32>
    tpu.vector_store %arg8[%c0_40, %c0_41], %97 {strides = array<i32>} : memref<16x32xf32, #tpu.memory_space<vmem>>, vector<16x32xf32>,
    return
  }
}

</mosaic_0001>

<llo_original>
// kernel: tpu_custom_call.1
$region0: #{tpu_custom_call.1}
  #allocation0 [shape = 'u32[]', space=smem, size = 0x4, offset = 0x4, fixed_abs, tag = 'smem constant byte address 0x4 - core index']
  #allocation1 [shape = 'u32[144,128]{1,0:T(1,128)}', space=vmem, size = 0x12000, scoped, tag = 'internal scratch']
  #allocation2 [shape = 'f32[16,32]{1,0:T(8,128)}', space=vmem, size = 0x2000, scoped, tag = 'scratch operand']
  %s0 = inlined_call_operand.hbm [shape: f32[16,32], index: 0, kind: input, shape index: {}]
  %s1 = inlined_call_operand.hbm [shape: f32[16,32], index: 1, kind: input, shape index: {}]
  %s2 = inlined_call_operand.hbm [shape: f32[32,32], index: 2, kind: input, shape index: {}]
  %s3 = inlined_call_operand.vmem [shape: f32[1,32], index: 3, kind: input, shape index: {}]
  %s4 = inlined_call_operand.hbm [shape: f32[32,64], index: 4, kind: input, shape index: {}]
  %s5 = inlined_call_operand.vmem [shape: f32[1,64], index: 5, kind: input, shape index: {}]
  %s6 = inlined_call_operand.hbm [shape: f32[32,32], index: 6, kind: input, shape index: {}]
  %s7 = inlined_call_operand.vmem [shape: f32[1,32], index: 7, kind: input, shape index: {}]
  %s8 = inlined_call_operand.hbm [shape: f32[16,32], index: 8, kind: output, shape index: {}]
  %s9 = sld [smem:[#allocation0]]
  $region62: #{tpu_custom_call.1} parent=0
    _
  %s11 = ssub.s32 1, %s9
  %s12 = scalar_select 0, %s11, %s9
  $region1: #{tpu_custom_call.1} parent=0
    #allocation3 [shape = 'u8[8192]{0}', space=vmem, size = 0x2000, scoped, tag = 'input window, operand 0, single buffered']
    #allocation4 [shape = 's32[1]{0}', space=sflag, size = 0x4, scoped, tag = 'scoped memory for tpu_custom_call.1']
    #allocation5 [shape = 's32[1]{0}', space=sflag, size = 0x4, scoped, tag = 'scoped memory for tpu_custom_call.1']
    #allocation6 [shape = 'u8[8192]{0}', space=vmem, size = 0x2000, scoped, tag = 'input window, operand 1, single buffered']
    #allocation7 [shape = 's32[1]{0}', space=sflag, size = 0x4, scoped, tag = 'scoped memory for tpu_custom_call.1']
    #allocation8 [shape = 'u8[16384]{0}', space=vmem, size = 0x4000, scoped, tag = 'input window, operand 2, single buffered']
    #allocation9 [shape = 'u8[16384]{0}', space=vmem, size = 0x4000, scoped, tag = 'input window, operand 4, single buffered']
    #allocation10 [shape = 's32[1]{0}', space=sflag, size = 0x4, scoped, tag = 'scoped memory for tpu_custom_call.1']
    #allocation11 [shape = 'u8[16384]{0}', space=vmem, size = 0x4000, scoped, tag = 'input window, operand 6, single buffered']
    #allocation12 [shape = 'u8[8192]{0}', space=vmem, size = 0x2000, scoped, tag = 'output window, operand 0, single buffered']
    %13 = vsyncpa [#allocation4], 0
    %14 = vsyncpa [#allocation7], 0
    %15 = vsyncpa [#allocation10], 0
    %16 = vsyncpa [#allocation5], 0
    // Predicated region
    $region2: #{tpu_custom_call.1} parent=1 // pred_check
      _
    $region3: #{tpu_custom_call.1} parent=1 // pred_check_branch
      %18 = sbr.rel (0) target = $region5
    $region4: #{tpu_custom_call.1} parent=1 // pred_region
      %s20 = ssub.s32 256, 256
      %21 = vsyncadd [#allocation4], %s20
      %s22 = sshll.u32 [#allocation3], 4
      %s23 = int_to_ptr.vmem [resolvable:$true] %s22
      %28 = dma.hbm_to_vmem [thread:$0]  %s0, 256, %s23, [#allocation4], 128, 128, 8
    $region5: #{tpu_custom_call.1} parent=1 // pred_fallthru
      _
    // Predicated region
    $region6: #{tpu_custom_call.1} parent=1 // pred_check
      _
    $region7: #{tpu_custom_call.1} parent=1 // pred_check_branch
      %30 = sbr.rel (0) target = $region9
    $region8: #{tpu_custom_call.1} parent=1 // pred_region
      %s32 = ssub.s32 256, 256
      %33 = vsyncadd [#allocation7], %s32
      %s34 = sshll.u32 [#allocation6], 4
      %s35 = int_to_ptr.vmem [resolvable:$true] %s34
      %40 = dma.hbm_to_vmem [thread:$0]  %s1, 256, %s35, [#allocation7], 128, 128, 8
    $region9: #{tpu_custom_call.1} parent=1 // pred_fallthru
      _
    // Predicated region
    $region10: #{tpu_custom_call.1} parent=1 // pred_check
      _
    $region11: #{tpu_custom_call.1} parent=1 // pred_check_branch
      %42 = sbr.rel (0) target = $region13
    $region12: #{tpu_custom_call.1} parent=1 // pred_region
      %s44 = ssub.s32 512, 512
      %45 = vsyncadd [#allocation7], %s44
      %s46 = sshll.u32 [#allocation8], 4
      %s47 = int_to_ptr.vmem [resolvable:$true] %s46
      %52 = dma.hbm_to_vmem [thread:$0]  %s2, 512, %s47, [#allocation7], 128, 128, 8
    $region13: #{tpu_custom_call.1} parent=1 // pred_fallthru
      _
    // Predicated region
    $region14: #{tpu_custom_call.1} parent=1 // pred_check
      _
    $region15: #{tpu_custom_call.1} parent=1 // pred_check_branch
      %54 = sbr.rel (0) target = $region17
    $region16: #{tpu_custom_call.1} parent=1 // pred_region
      _
    $region17: #{tpu_custom_call.1} parent=1 // pred_fallthru
      _
    // Predicated region
    $region18: #{tpu_custom_call.1} parent=1 // pred_check
      _
    $region19: #{tpu_custom_call.1} parent=1 // pred_check_branch
      %56 = sbr.rel (0) target = $region21
    $region20: #{tpu_custom_call.1} parent=1 // pred_region
      %s58 = ssub.s32 512, 512
      %59 = vsyncadd [#allocation10], %s58
      %s60 = sshll.u32 [#allocation9], 4
      %s61 = int_to_ptr.vmem [resolvable:$true] %s60
      %66 = dma.hbm_to_vmem [thread:$0]  %s4, 512, %s61, [#allocation10], 128, 128, 8
    $region21: #{tpu_custom_call.1} parent=1 // pred_fallthru
      _
    // Predicated region
    $region22: #{tpu_custom_call.1} parent=1 // pred_check
      _
    $region23: #{tpu_custom_call.1} parent=1 // pred_check_branch
      %68 = sbr.rel (0) target = $region25
    $region24: #{tpu_custom_call.1} parent=1 // pred_region
      _
    $region25: #{tpu_custom_call.1} parent=1 // pred_fallthru
      _
    // Predicated region
    $region26: #{tpu_custom_call.1} parent=1 // pred_check
      _
    $region27: #{tpu_custom_call.1} parent=1 // pred_check_branch
      %70 = sbr.rel (0) target = $region29
    $region28: #{tpu_custom_call.1} parent=1 // pred_region
      %s72 = ssub.s32 512, 512
      %73 = vsyncadd [#allocation10], %s72
      %s74 = sshll.u32 [#allocation11], 4
      %s75 = int_to_ptr.vmem [resolvable:$true] %s74
      %80 = dma.hbm_to_vmem [thread:$0]  %s6, 512, %s75, [#allocation10], 128, 128, 8
    $region29: #{tpu_custom_call.1} parent=1 // pred_fallthru
      _
    // Predicated region
    $region30: #{tpu_custom_call.1} parent=1 // pred_check
      _
    $region31: #{tpu_custom_call.1} parent=1 // pred_check_branch
      %82 = sbr.rel (0) target = $region33
    $region32: #{tpu_custom_call.1} parent=1 // pred_region
      _
    $region33: #{tpu_custom_call.1} parent=1 // pred_fallthru
      _
    // Predicated region
    $region34: #{tpu_custom_call.1} parent=1 // pred_check
      _
    $region35: #{tpu_custom_call.1} parent=1 // pred_check_branch
      %84 = sbr.rel (0) target = $region37
    $region36: #{tpu_custom_call.1} parent=1 // pred_region
      %85 = dma.done [#allocation4], 256
    $region37: #{tpu_custom_call.1} parent=1 // pred_fallthru
      _
    // Predicated region
    $region38: #{tpu_custom_call.1} parent=1 // pred_check
      _
    $region39: #{tpu_custom_call.1} parent=1 // pred_check_branch
      %87 = sbr.rel (0) target = $region41
    $region40: #{tpu_custom_call.1} parent=1 // pred_region
      %88 = dma.done [#allocation7], 256
    $region41: #{tpu_custom_call.1} parent=1 // pred_fallthru
      _
    // Predicated region
    $region42: #{tpu_custom_call.1} parent=1 // pred_check
      _
    $region43: #{tpu_custom_call.1} parent=1 // pred_check_branch
      %90 = sbr.rel (0) target = $region45
    $region44: #{tpu_custom_call.1} parent=1 // pred_region
      %91 = dma.done [#allocation7], 512
    $region45: #{tpu_custom_call.1} parent=1 // pred_fallthru
      _
    // Predicated region
    $region46: #{tpu_custom_call.1} parent=1 // pred_check
      _
    $region47: #{tpu_custom_call.1} parent=1 // pred_check_branch
      %93 = sbr.rel (0) target = $region49
    $region48: #{tpu_custom_call.1} parent=1 // pred_region
      %94 = dma.done [#allocation10], 512
    $region49: #{tpu_custom_call.1} parent=1 // pred_fallthru
      _
    // Predicated region
    $region50: #{tpu_custom_call.1} parent=1 // pred_check
      _
    $region51: #{tpu_custom_call.1} parent=1 // pred_check_branch
      %96 = sbr.rel (0) target = $region53
    $region52: #{tpu_custom_call.1} parent=1 // pred_region
      %97 = dma.done [#allocation10], 512
    $region53: #{tpu_custom_call.1} parent=1 // pred_fallthru
      _
    %v98 = vld [vmem:[#allocation3] sm:$0xff]
    %v99 = vld [vmem:[#allocation3 + $0x8] sm:$0xff]
    %v100 = vld [vmem:[#allocation8] sm:$0xff]
    %v101 = vld [vmem:[#allocation8 + $0x8] sm:$0xff]
    %v102 = vld [vmem:[#allocation8 + $0x10] sm:$0xff]
    %v103 = vld [vmem:[#allocation8 + $0x18] sm:$0xff]
    %v104 = vld [vmem:[%s3] sm:$0x1]
    %v106 = vlaneseq
    %v107 = vshrl.u32 %v106, 7
    %v108 = vsub.s32 0, %v107
    %v109 = vrot.slane %v104, %v108
    %vm111 = vcmask 261120
    %v113 = vsel %vm111, %v98, 0
    %v116 = vsel %vm111, %v99, 0
    %118 = vmatprep.subr.mxu0 0.0
    %119 = vmatpush1.msra.mxu0 0.0
    %120 = vmatprep.subr.mxu0 0.0
    %121 = vmatpush1.msra.mxu0 0.0
    %122 = vmatprep.subr.mxu0 0.0
    %123 = vmatpush1.msra.mxu0 0.0
    %124 = vmatprep.subr.mxu0 0.0
    %125 = vmatpush1.msra.mxu0 0.0
    %126 = vmatprep.subr.mxu0 0.0
    %127 = vmatpush1.msra.mxu0 0.0
    %128 = vmatprep.subr.mxu0 0.0
    %129 = vmatpush1.msra.mxu0 0.0
    %130 = vmatprep.subr.mxu0 0.0
    %131 = vmatpush1.msra.mxu0 0.0
    %132 = vmatprep.subr.mxu0 0.0
    %133 = vmatpush1.msra.mxu0 0.0
    %134 = vmatprep.subr.mxu0 0.0
    %135 = vmatpush1.msra.mxu0 0.0
    %136 = vmatprep.subr.mxu0 0.0
    %137 = vmatpush1.msra.mxu0 0.0
    %138 = vmatprep.subr.mxu0 0.0
    %139 = vmatpush1.msra.mxu0 0.0
    %140 = vmatprep.subr.mxu0 0.0
    %141 = vmatpush1.msra.mxu0 0.0
    %142 = vmatprep.subr.mxu0 0.0
    %143 = vmatpush1.msra.mxu0 %v103
    %144 = vmatprep.subr.mxu0 0.0
    %145 = vmatpush1.msra.mxu0 %v102
    %146 = vmatprep.subr.mxu0 0.0
    %147 = vmatpush1.msra.mxu0 %v101
    %148 = vmatprep.subr.mxu0 0.0
    %149 = vmatpush1.msra.mxu0 %v100
    %150 = vmatprep.subr.mxu0 0.0
    %151 = vmatpush2.msra.mxu0 0.0
    %152 = vmatprep.subr.mxu0 0.0
    %153 = vmatpush2.msra.mxu0 0.0
    %154 = vmatprep.subr.mxu0 0.0
    %155 = vmatpush2.msra.mxu0 0.0
    %156 = vmatprep.subr.mxu0 0.0
    %157 = vmatpush2.msra.mxu0 0.0
    %158 = vmatprep.subr.mxu0 0.0
    %159 = vmatpush2.msra.mxu0 0.0
    %160 = vmatprep.subr.mxu0 0.0
    %161 = vmatpush2.msra.mxu0 0.0
    %162 = vmatprep.subr.mxu0 0.0
    %163 = vmatpush2.msra.mxu0 0.0
    %164 = vmatprep.subr.mxu0 0.0
    %165 = vmatpush2.msra.mxu0 0.0
    %166 = vmatprep.subr.mxu0 0.0
    %167 = vmatpush2.msra.mxu0 0.0
    %168 = vmatprep.subr.mxu0 0.0
    %169 = vmatpush2.msra.mxu0 0.0
    %170 = vmatprep.subr.mxu0 0.0
    %171 = vmatpush2.msra.mxu0 0.0
    %172 = vmatprep.subr.mxu0 0.0
    %173 = vmatpush2.msra.mxu0 0.0
    %174 = vmatprep.subr.mxu0 0.0
    %175 = vmatpush2.msra.mxu0 0.0
    %176 = vmatprep.subr.mxu0 0.0
    %177 = vmatpush2.msra.mxu0 0.0
    %178 = vmatprep.subr.mxu0 0.0
    %179 = vmatpush2.msra.mxu0 0.0
    %180 = vmatprep.subr.mxu0 0.0
    %181 = vmatpush2.msra.mxu0 0.0
    %182 = vmatprep.mubr.f32.mxu0 0.0
    %183 = vmatmul.mubr.f32.gmra.mxu0 %v113
    %v184 = vpop.f32.mrf.mxu0
    %v185 = vadd.f32 %v109, %v184
    %v186 = vpop.f32.mrf.mxu0
    %187 = vmatprep.mubr.f32.mxu0 0.0
    %188 = vmatmul.mubr.f32.gmra.mxu0 %v116
    %v189 = vpop.f32.mrf.mxu0
    %v190 = vadd.f32 %v109, %v189
    %v191 = vpop.f32.mrf.mxu0
    %192 = vdwg.mxu0
    %v193 = vld [vmem:[#allocation6] sm:$0xff]
    %v194 = vld [vmem:[#allocation6 + $0x8] sm:$0xff]
    %v195 = vld [vmem:[#allocation9] sm:$0xff]
    %v196 = vld [vmem:[#allocation9 + $0x8] sm:$0xff]
    %v197 = vld [vmem:[#allocation9 + $0x10] sm:$0xff]
    %v198 = vld [vmem:[#allocation9 + $0x18] sm:$0xff]
    %v199 = vld [vmem:[%s5] sm:$0x1]
    %v201 = vlaneseq
    %v202 = vshrl.u32 %v201, 7
    %v203 = vsub.s32 0, %v202
    %v204 = vrot.slane %v199, %v203
    %v207 = vsel %vm111, %v193, 0
    %v210 = vsel %vm111, %v194, 0
    %212 = vmatprep.subr.mxu0 0.0
    %213 = vmatpush1.msra.mxu0 0.0
    %214 = vmatprep.subr.mxu0 0.0
    %215 = vmatpush1.msra.mxu0 0.0
    %216 = vmatprep.subr.mxu0 0.0
    %217 = vmatpush1.msra.mxu0 0.0
    %218 = vmatprep.subr.mxu0 0.0
    %219 = vmatpush1.msra.mxu0 0.0
    %220 = vmatprep.subr.mxu0 0.0
    %221 = vmatpush1.msra.mxu0 0.0
    %222 = vmatprep.subr.mxu0 0.0
    %223 = vmatpush1.msra.mxu0 0.0
    %224 = vmatprep.subr.mxu0 0.0
    %225 = vmatpush1.msra.mxu0 0.0
    %226 = vmatprep.subr.mxu0 0.0
    %227 = vmatpush1.msra.mxu0 0.0
    %228 = vmatprep.subr.mxu0 0.0
    %229 = vmatpush1.msra.mxu0 0.0
    %230 = vmatprep.subr.mxu0 0.0
    %231 = vmatpush1.msra.mxu0 0.0
    %232 = vmatprep.subr.mxu0 0.0
    %233 = vmatpush1.msra.mxu0 0.0
    %234 = vmatprep.subr.mxu0 0.0
    %235 = vmatpush1.msra.mxu0 0.0
    %236 = vmatprep.subr.mxu0 0.0
    %237 = vmatpush1.msra.mxu0 %v198
    %238 = vmatprep.subr.mxu0 0.0
    %239 = vmatpush1.msra.mxu0 %v197
    %240 = vmatprep.subr.mxu0 0.0
    %241 = vmatpush1.msra.mxu0 %v196
    %242 = vmatprep.subr.mxu0 0.0
    %243 = vmatpush1.msra.mxu0 %v195
    %244 = vmatprep.subr.mxu0 0.0
    %245 = vmatpush2.msra.mxu0 0.0
    %246 = vmatprep.subr.mxu0 0.0
    %247 = vmatpush2.msra.mxu0 0.0
    %248 = vmatprep.subr.mxu0 0.0
    %249 = vmatpush2.msra.mxu0 0.0
    %250 = vmatprep.subr.mxu0 0.0
    %251 = vmatpush2.msra.mxu0 0.0
    %252 = vmatprep.subr.mxu0 0.0
    %253 = vmatpush2.msra.mxu0 0.0
    %254 = vmatprep.subr.mxu0 0.0
    %255 = vmatpush2.msra.mxu0 0.0
    %256 = vmatprep.subr.mxu0 0.0
    %257 = vmatpush2.msra.mxu0 0.0
    %258 = vmatprep.subr.mxu0 0.0
    %259 = vmatpush2.msra.mxu0 0.0
    %260 = vmatprep.subr.mxu0 0.0
    %261 = vmatpush2.msra.mxu0 0.0
    %262 = vmatprep.subr.mxu0 0.0
    %263 = vmatpush2.msra.mxu0 0.0
    %264 = vmatprep.subr.mxu0 0.0
    %265 = vmatpush2.msra.mxu0 0.0
    %266 = vmatprep.subr.mxu0 0.0
    %267 = vmatpush2.msra.mxu0 0.0
    %268 = vmatprep.subr.mxu0 0.0
    %269 = vmatpush2.msra.mxu0 0.0
    %270 = vmatprep.subr.mxu0 0.0
    %271 = vmatpush2.msra.mxu0 0.0
    %272 = vmatprep.subr.mxu0 0.0
    %273 = vmatpush2.msra.mxu0 0.0
    %274 = vmatprep.subr.mxu0 0.0
    %275 = vmatpush2.msra.mxu0 0.0
    %276 = vmatprep.mubr.f32.mxu0 0.0
    %277 = vmatmul.mubr.f32.gmra.mxu0 %v207
    %v278 = vpop.f32.mrf.mxu0
    %v279 = vadd.f32 %v204, %v278
    %v280 = vpop.f32.mrf.mxu0
    %281 = vmatprep.mubr.f32.mxu0 0.0
    %282 = vmatmul.mubr.f32.gmra.mxu0 %v210
    %v283 = vpop.f32.mrf.mxu0
    %v284 = vadd.f32 %v204, %v283
    %v285 = vpop.f32.mrf.mxu0
    %286 = vdwg.mxu0
    %vm287 = vcmask 64512
    %v289 = vsel %vm287, %v185, 0
    %v292 = vsel %vm287, %v279, 0
    %294 = vmatprep.subr.mxu0 0.0
    %295 = vmatpush1.xpose.msra.mxu0 0.0
    %296 = vmatprep.subr.mxu0 0.0
    %297 = vmatpush1.xpose.msra.mxu0 0.0
    %298 = vmatprep.subr.mxu0 0.0
    %299 = vmatpush1.xpose.msra.mxu0 0.0
    %300 = vmatprep.subr.mxu0 0.0
    %301 = vmatpush1.xpose.msra.mxu0 0.0
    %302 = vmatprep.subr.mxu0 0.0
    %303 = vmatpush1.xpose.msra.mxu0 0.0
    %304 = vmatprep.subr.mxu0 0.0
    %305 = vmatpush1.xpose.msra.mxu0 0.0
    %306 = vmatprep.subr.mxu0 0.0
    %307 = vmatpush1.xpose.msra.mxu0 0.0
    %308 = vmatprep.subr.mxu0 0.0
    %309 = vmatpush1.xpose.msra.mxu0 0.0
    %310 = vmatprep.subr.mxu0 0.0
    %311 = vmatpush1.xpose.msra.mxu0 0.0
    %312 = vmatprep.subr.mxu0 0.0
    %313 = vmatpush1.xpose.msra.mxu0 0.0
    %314 = vmatprep.subr.mxu0 0.0
    %315 = vmatpush1.xpose.msra.mxu0 0.0
    %316 = vmatprep.subr.mxu0 0.0
    %317 = vmatpush1.xpose.msra.mxu0 0.0
    %318 = vmatprep.subr.mxu0 0.0
    %319 = vmatpush1.xpose.msra.mxu0 0.0
    %320 = vmatprep.subr.mxu0 0.0
    %321 = vmatpush1.xpose.msra.mxu0 0.0
    %322 = vmatprep.subr.mxu0 0.0
    %323 = vmatpush1.xpose.msra.mxu0 0.0
    %324 = vmatprep.subr.mxu0 0.0
    %325 = vmatpush1.xpose.msra.mxu0 %v292
    %326 = vmatprep.subr.mxu0 0.0
    %327 = vmatpush2.xpose.msra.mxu0 0.0
    %328 = vmatprep.subr.mxu0 0.0
    %329 = vmatpush2.xpose.msra.mxu0 0.0
    %330 = vmatprep.subr.mxu0 0.0
    %331 = vmatpush2.xpose.msra.mxu0 0.0
    %332 = vmatprep.subr.mxu0 0.0
    %333 = vmatpush2.xpose.msra.mxu0 0.0
    %334 = vmatprep.subr.mxu0 0.0
    %335 = vmatpush2.xpose.msra.mxu0 0.0
    %336 = vmatprep.subr.mxu0 0.0
    %337 = vmatpush2.xpose.msra.mxu0 0.0
    %338 = vmatprep.subr.mxu0 0.0
    %339 = vmatpush2.xpose.msra.mxu0 0.0
    %340 = vmatprep.subr.mxu0 0.0
    %341 = vmatpush2.xpose.msra.mxu0 0.0
    %342 = vmatprep.subr.mxu0 0.0
    %343 = vmatpush2.xpose.msra.mxu0 0.0
    %344 = vmatprep.subr.mxu0 0.0
    %345 = vmatpush2.xpose.msra.mxu0 0.0
    %346 = vmatprep.subr.mxu0 0.0
    %347 = vmatpush2.xpose.msra.mxu0 0.0
    %348 = vmatprep.subr.mxu0 0.0
    %349 = vmatpush2.xpose.msra.mxu0 0.0
    %350 = vmatprep.subr.mxu0 0.0
    %351 = vmatpush2.xpose.msra.mxu0 0.0
    %352 = vmatprep.subr.mxu0 0.0
    %353 = vmatpush2.xpose.msra.mxu0 0.0
    %354 = vmatprep.subr.mxu0 0.0
    %355 = vmatpush2.xpose.msra.mxu0 0.0
    %356 = vmatprep.subr.mxu0 0.0
    %357 = vmatpush2.xpose.msra.mxu0 0.0
    %358 = vmatprep.mubr.f32.mxu0 0.0
    %359 = vmatmul.mubr.f32.gmra.mxu0 %v289
    %v360 = vpop.f32.mrf.mxu0
    %v361 = vadd.f32 0.0, %v360
    %v362 = vpop.f32.mrf.mxu0
    %363 = vdwg.mxu0
    %v365 = vsel %vm287, %v190, 0
    %v368 = vsel %vm287, %v284, 0
    %370 = vmatprep.subr.mxu0 0.0
    %371 = vmatpush1.xpose.msra.mxu0 0.0
    %372 = vmatprep.subr.mxu0 0.0
    %373 = vmatpush1.xpose.msra.mxu0 0.0
    %374 = vmatprep.subr.mxu0 0.0
    %375 = vmatpush1.xpose.msra.mxu0 0.0
    %376 = vmatprep.subr.mxu0 0.0
    %377 = vmatpush1.xpose.msra.mxu0 0.0
    %378 = vmatprep.subr.mxu0 0.0
    %379 = vmatpush1.xpose.msra.mxu0 0.0
    %380 = vmatprep.subr.mxu0 0.0
    %381 = vmatpush1.xpose.msra.mxu0 0.0
    %382 = vmatprep.subr.mxu0 0.0
    %383 = vmatpush1.xpose.msra.mxu0 0.0
    %384 = vmatprep.subr.mxu0 0.0
    %385 = vmatpush1.xpose.msra.mxu0 0.0
    %386 = vmatprep.subr.mxu0 0.0
    %387 = vmatpush1.xpose.msra.mxu0 0.0
    %388 = vmatprep.subr.mxu0 0.0
    %389 = vmatpush1.xpose.msra.mxu0 0.0
    %390 = vmatprep.subr.mxu0 0.0
    %391 = vmatpush1.xpose.msra.mxu0 0.0
    %392 = vmatprep.subr.mxu0 0.0
    %393 = vmatpush1.xpose.msra.mxu0 0.0
    %394 = vmatprep.subr.mxu0 0.0
    %395 = vmatpush1.xpose.msra.mxu0 0.0
    %396 = vmatprep.subr.mxu0 0.0
    %397 = vmatpush1.xpose.msra.mxu0 0.0
    %398 = vmatprep.subr.mxu0 0.0
    %399 = vmatpush1.xpose.msra.mxu0 0.0
    %400 = vmatprep.subr.mxu0 0.0
    %401 = vmatpush1.xpose.msra.mxu0 %v368
    %402 = vmatprep.subr.mxu0 0.0
    %403 = vmatpush2.xpose.msra.mxu0 0.0
    %404 = vmatprep.subr.mxu0 0.0
    %405 = vmatpush2.xpose.msra.mxu0 0.0
    %406 = vmatprep.subr.mxu0 0.0
    %407 = vmatpush2.xpose.msra.mxu0 0.0
    %408 = vmatprep.subr.mxu0 0.0
    %409 = vmatpush2.xpose.msra.mxu0 0.0
    %410 = vmatprep.subr.mxu0 0.0
    %411 = vmatpush2.xpose.msra.mxu0 0.0
    %412 = vmatprep.subr.mxu0 0.0
    %413 = vmatpush2.xpose.msra.mxu0 0.0
    %414 = vmatprep.subr.mxu0 0.0
    %415 = vmatpush2.xpose.msra.mxu0 0.0
    %416 = vmatprep.subr.mxu0 0.0
    %417 = vmatpush2.xpose.msra.mxu0 0.0
    %418 = vmatprep.subr.mxu0 0.0
    %419 = vmatpush2.xpose.msra.mxu0 0.0
    %420 = vmatprep.subr.mxu0 0.0
    %421 = vmatpush2.xpose.msra.mxu0 0.0
    %422 = vmatprep.subr.mxu0 0.0
    %423 = vmatpush2.xpose.msra.mxu0 0.0
    %424 = vmatprep.subr.mxu0 0.0
    %425 = vmatpush2.xpose.msra.mxu0 0.0
    %426 = vmatprep.subr.mxu0 0.0
    %427 = vmatpush2.xpose.msra.mxu0 0.0
    %428 = vmatprep.subr.mxu0 0.0
    %429 = vmatpush2.xpose.msra.mxu0 0.0
    %430 = vmatprep.subr.mxu0 0.0
    %431 = vmatpush2.xpose.msra.mxu0 0.0
    %432 = vmatprep.subr.mxu0 0.0
    %433 = vmatpush2.xpose.msra.mxu0 0.0
    %434 = vmatprep.mubr.f32.mxu0 0.0
    %435 = vmatmul.mubr.f32.gmra.mxu0 %v365
    %v436 = vpop.f32.mrf.mxu0
    %v437 = vadd.f32 0.0, %v436
    %v438 = vpop.f32.mrf.mxu0
    %439 = vdwg.mxu0
    %v440 = vsel %vm287, %v361, -inf
    %441 = vmax.xlane.f32.xlu0 %v440
    %v442 = vpop.xlane.xlu0 %441
    %v443 = vsel %vm287, %v437, -inf
    %444 = vmax.xlane.f32.xlu0 %v443
    %v445 = vpop.xlane.xlu0 %444
    %v446 = vsub.f32 %v361, %v442
    %v447 = vsub.f32 %v437, %v445
    %v448 = vmul.f32 %v446, 1.442695
    %v449 = vpow.pop %v448
    %v450 = vmul.f32 %v447, 1.442695
    %v451 = vpow.pop %v450
    %v452 = vsel %vm287, %v449, 0.0
    %453 = vadd.xlane.f32.xlu0 %v452
    %v454 = vpop.xlane.xlu0 %453
    %v455 = vsel %vm287, %v451, 0.0
    %456 = vadd.xlane.f32.xlu0 %v455
    %v457 = vpop.xlane.xlu0 %456
    %v458 = vrcp.pop %v454
    %v459 = vrcp.pop %v457
    %v460 = vmul.f32 %v449, %v458
    %v461 = vmul.f32 %v451, %v459
    %462 = vrot.lane.b32.xlu0 %v279, 96
    %v463 = vpop.permute.xlu0 %462
    %v466 = vsel %vm287, %v460, 0
    %468 = vmatprep.subr.mxu0 0.0
    %469 = vmatpush1.msra.mxu0 0.0
    %470 = vmatprep.subr.mxu0 0.0
    %471 = vmatpush1.msra.mxu0 0.0
    %472 = vmatprep.subr.mxu0 0.0
    %473 = vmatpush1.msra.mxu0 0.0
    %474 = vmatprep.subr.mxu0 0.0
    %475 = vmatpush1.msra.mxu0 0.0
    %476 = vmatprep.subr.mxu0 0.0
    %477 = vmatpush1.msra.mxu0 0.0
    %478 = vmatprep.subr.mxu0 0.0
    %479 = vmatpush1.msra.mxu0 0.0
    %480 = vmatprep.subr.mxu0 0.0
    %481 = vmatpush1.msra.mxu0 0.0
    %482 = vmatprep.subr.mxu0 0.0
    %483 = vmatpush1.msra.mxu0 0.0
    %484 = vmatprep.subr.mxu0 0.0
    %485 = vmatpush1.msra.mxu0 0.0
    %486 = vmatprep.subr.mxu0 0.0
    %487 = vmatpush1.msra.mxu0 0.0
    %488 = vmatprep.subr.mxu0 0.0
    %489 = vmatpush1.msra.mxu0 0.0
    %490 = vmatprep.subr.mxu0 0.0
    %491 = vmatpush1.msra.mxu0 0.0
    %492 = vmatprep.subr.mxu0 0.0
    %493 = vmatpush1.msra.mxu0 0.0
    %494 = vmatprep.subr.mxu0 0.0
    %495 = vmatpush1.msra.mxu0 0.0
    %496 = vmatprep.subr.mxu0 0.0
    %497 = vmatpush1.msra.mxu0 0.0
    %498 = vmatprep.subr.mxu0 0.0
    %499 = vmatpush1.msra.mxu0 %v463
    %500 = vmatprep.subr.mxu0 0.0
    %501 = vmatpush2.msra.mxu0 0.0
    %502 = vmatprep.subr.mxu0 0.0
    %503 = vmatpush2.msra.mxu0 0.0
    %504 = vmatprep.subr.mxu0 0.0
    %505 = vmatpush2.msra.mxu0 0.0
    %506 = vmatprep.subr.mxu0 0.0
    %507 = vmatpush2.msra.mxu0 0.0
    %508 = vmatprep.subr.mxu0 0.0
    %509 = vmatpush2.msra.mxu0 0.0
    %510 = vmatprep.subr.mxu0 0.0
    %511 = vmatpush2.msra.mxu0 0.0
    %512 = vmatprep.subr.mxu0 0.0
    %513 = vmatpush2.msra.mxu0 0.0
    %514 = vmatprep.subr.mxu0 0.0
    %515 = vmatpush2.msra.mxu0 0.0
    %516 = vmatprep.subr.mxu0 0.0
    %517 = vmatpush2.msra.mxu0 0.0
    %518 = vmatprep.subr.mxu0 0.0
    %519 = vmatpush2.msra.mxu0 0.0
    %520 = vmatprep.subr.mxu0 0.0
    %521 = vmatpush2.msra.mxu0 0.0
    %522 = vmatprep.subr.mxu0 0.0
    %523 = vmatpush2.msra.mxu0 0.0
    %524 = vmatprep.subr.mxu0 0.0
    %525 = vmatpush2.msra.mxu0 0.0
    %526 = vmatprep.subr.mxu0 0.0
    %527 = vmatpush2.msra.mxu0 0.0
    %528 = vmatprep.subr.mxu0 0.0
    %529 = vmatpush2.msra.mxu0 0.0
    %530 = vmatprep.subr.mxu0 0.0
    %531 = vmatpush2.msra.mxu0 0.0
    %532 = vmatprep.mubr.f32.mxu0 0.0
    %533 = vmatmul.mubr.f32.gmra.mxu0 %v466
    %v534 = vpop.f32.mrf.mxu0
    %v535 = vadd.f32 0.0, %v534
    %v536 = vpop.f32.mrf.mxu0
    %537 = vdwg.mxu0
    %538 = vrot.lane.b32.xlu0 %v284, 96
    %v539 = vpop.permute.xlu0 %538
    %v542 = vsel %vm287, %v461, 0
    %544 = vmatprep.subr.mxu0 0.0
    %545 = vmatpush1.msra.mxu0 0.0
    %546 = vmatprep.subr.mxu0 0.0
    %547 = vmatpush1.msra.mxu0 0.0
    %548 = vmatprep.subr.mxu0 0.0
    %549 = vmatpush1.msra.mxu0 0.0
    %550 = vmatprep.subr.mxu0 0.0
    %551 = vmatpush1.msra.mxu0 0.0
    %552 = vmatprep.subr.mxu0 0.0
    %553 = vmatpush1.msra.mxu0 0.0
    %554 = vmatprep.subr.mxu0 0.0
    %555 = vmatpush1.msra.mxu0 0.0
    %556 = vmatprep.subr.mxu0 0.0
    %557 = vmatpush1.msra.mxu0 0.0
    %558 = vmatprep.subr.mxu0 0.0
    %559 = vmatpush1.msra.mxu0 0.0
    %560 = vmatprep.subr.mxu0 0.0
    %561 = vmatpush1.msra.mxu0 0.0
    %562 = vmatprep.subr.mxu0 0.0
    %563 = vmatpush1.msra.mxu0 0.0
    %564 = vmatprep.subr.mxu0 0.0
    %565 = vmatpush1.msra.mxu0 0.0
    %566 = vmatprep.subr.mxu0 0.0
    %567 = vmatpush1.msra.mxu0 0.0
    %568 = vmatprep.subr.mxu0 0.0
    %569 = vmatpush1.msra.mxu0 0.0
    %570 = vmatprep.subr.mxu0 0.0
    %571 = vmatpush1.msra.mxu0 0.0
    %572 = vmatprep.subr.mxu0 0.0
    %573 = vmatpush1.msra.mxu0 0.0
    %574 = vmatprep.subr.mxu0 0.0
    %575 = vmatpush1.msra.mxu0 %v539
    %576 = vmatprep.subr.mxu0 0.0
    %577 = vmatpush2.msra.mxu0 0.0
    %578 = vmatprep.subr.mxu0 0.0
    %579 = vmatpush2.msra.mxu0 0.0
    %580 = vmatprep.subr.mxu0 0.0
    %581 = vmatpush2.msra.mxu0 0.0
    %582 = vmatprep.subr.mxu0 0.0
    %583 = vmatpush2.msra.mxu0 0.0
    %584 = vmatprep.subr.mxu0 0.0
    %585 = vmatpush2.msra.mxu0 0.0
    %586 = vmatprep.subr.mxu0 0.0
    %587 = vmatpush2.msra.mxu0 0.0
    %588 = vmatprep.subr.mxu0 0.0
    %589 = vmatpush2.msra.mxu0 0.0
    %590 = vmatprep.subr.mxu0 0.0
    %591 = vmatpush2.msra.mxu0 0.0
    %592 = vmatprep.subr.mxu0 0.0
    %593 = vmatpush2.msra.mxu0 0.0
    %594 = vmatprep.subr.mxu0 0.0
    %595 = vmatpush2.msra.mxu0 0.0
    %596 = vmatprep.subr.mxu0 0.0
    %597 = vmatpush2.msra.mxu0 0.0
    %598 = vmatprep.subr.mxu0 0.0
    %599 = vmatpush2.msra.mxu0 0.0
    %600 = vmatprep.subr.mxu0 0.0
    %601 = vmatpush2.msra.mxu0 0.0
    %602 = vmatprep.subr.mxu0 0.0
    %603 = vmatpush2.msra.mxu0 0.0
    %604 = vmatprep.subr.mxu0 0.0
    %605 = vmatpush2.msra.mxu0 0.0
    %606 = vmatprep.subr.mxu0 0.0
    %607 = vmatpush2.msra.mxu0 0.0
    %608 = vmatprep.mubr.f32.mxu0 0.0
    %609 = vmatmul.mubr.f32.gmra.mxu0 %v542
    %v610 = vpop.f32.mrf.mxu0
    %v611 = vadd.f32 0.0, %v610
    %v612 = vpop.f32.mrf.mxu0
    %613 = vdwg.mxu0
    %614 = vst.msk [vmem:[#allocation2] sm:$0xff] %vm287, %v535
    %615 = vst.msk [vmem:[#allocation2 + $0x8] sm:$0xff] %vm287, %v611
    %616 = vrot.lane.b32.xlu0 %v185, 120
    %v617 = vpop.permute.xlu0 %616
    %618 = vrot.lane.b32.xlu0 %v279, 120
    %v619 = vpop.permute.xlu0 %618
    %v620 = vsel %vm287, %v617, 0
    %v622 = vsel %vm287, %v619, 0
    %624 = vmatprep.subr.mxu0 0.0
    %625 = vmatpush1.xpose.msra.mxu0 0.0
    %626 = vmatprep.subr.mxu0 0.0
    %627 = vmatpush1.xpose.msra.mxu0 0.0
    %628 = vmatprep.subr.mxu0 0.0
    %629 = vmatpush1.xpose.msra.mxu0 0.0
    %630 = vmatprep.subr.mxu0 0.0
    %631 = vmatpush1.xpose.msra.mxu0 0.0
    %632 = vmatprep.subr.mxu0 0.0
    %633 = vmatpush1.xpose.msra.mxu0 0.0
    %634 = vmatprep.subr.mxu0 0.0
    %635 = vmatpush1.xpose.msra.mxu0 0.0
    %636 = vmatprep.subr.mxu0 0.0
    %637 = vmatpush1.xpose.msra.mxu0 0.0
    %638 = vmatprep.subr.mxu0 0.0
    %639 = vmatpush1.xpose.msra.mxu0 0.0
    %640 = vmatprep.subr.mxu0 0.0
    %641 = vmatpush1.xpose.msra.mxu0 0.0
    %642 = vmatprep.subr.mxu0 0.0
    %643 = vmatpush1.xpose.msra.mxu0 0.0
    %644 = vmatprep.subr.mxu0 0.0
    %645 = vmatpush1.xpose.msra.mxu0 0.0
    %646 = vmatprep.subr.mxu0 0.0
    %647 = vmatpush1.xpose.msra.mxu0 0.0
    %648 = vmatprep.subr.mxu0 0.0
    %649 = vmatpush1.xpose.msra.mxu0 0.0
    %650 = vmatprep.subr.mxu0 0.0
    %651 = vmatpush1.xpose.msra.mxu0 0.0
    %652 = vmatprep.subr.mxu0 0.0
    %653 = vmatpush1.xpose.msra.mxu0 0.0
    %654 = vmatprep.subr.mxu0 0.0
    %655 = vmatpush1.xpose.msra.mxu0 %v622
    %656 = vmatprep.subr.mxu0 0.0
    %657 = vmatpush2.xpose.msra.mxu0 0.0
    %658 = vmatprep.subr.mxu0 0.0
    %659 = vmatpush2.xpose.msra.mxu0 0.0
    %660 = vmatprep.subr.mxu0 0.0
    %661 = vmatpush2.xpose.msra.mxu0 0.0
    %662 = vmatprep.subr.mxu0 0.0
    %663 = vmatpush2.xpose.msra.mxu0 0.0
    %664 = vmatprep.subr.mxu0 0.0
    %665 = vmatpush2.xpose.msra.mxu0 0.0
    %666 = vmatprep.subr.mxu0 0.0
    %667 = vmatpush2.xpose.msra.mxu0 0.0
    %668 = vmatprep.subr.mxu0 0.0
    %669 = vmatpush2.xpose.msra.mxu0 0.0
    %670 = vmatprep.subr.mxu0 0.0
    %671 = vmatpush2.xpose.msra.mxu0 0.0
    %672 = vmatprep.subr.mxu0 0.0
    %673 = vmatpush2.xpose.msra.mxu0 0.0
    %674 = vmatprep.subr.mxu0 0.0
    %675 = vmatpush2.xpose.msra.mxu0 0.0
    %676 = vmatprep.subr.mxu0 0.0
    %677 = vmatpush2.xpose.msra.mxu0 0.0
    %678 = vmatprep.subr.mxu0 0.0
    %679 = vmatpush2.xpose.msra.mxu0 0.0
    %680 = vmatprep.subr.mxu0 0.0
    %681 = vmatpush2.xpose.msra.mxu0 0.0
    %682 = vmatprep.subr.mxu0 0.0
    %683 = vmatpush2.xpose.msra.mxu0 0.0
    %684 = vmatprep.subr.mxu0 0.0
    %685 = vmatpush2.xpose.msra.mxu0 0.0
    %686 = vmatprep.subr.mxu0 0.0
    %687 = vmatpush2.xpose.msra.mxu0 0.0
    %688 = vmatprep.mubr.f32.mxu0 0.0
    %689 = vmatmul.mubr.f32.gmra.mxu0 %v620
    %v690 = vpop.f32.mrf.mxu0
    %v691 = vadd.f32 0.0, %v690
    %v692 = vpop.f32.mrf.mxu0
    %693 = vdwg.mxu0
    %694 = vrot.lane.b32.xlu0 %v190, 120
    %v695 = vpop.permute.xlu0 %694
    %696 = vrot.lane.b32.xlu0 %v284, 120
    %v697 = vpop.permute.xlu0 %696
    %v698 = vsel %vm287, %v695, 0
    %v700 = vsel %vm287, %v697, 0
    %702 = vmatprep.subr.mxu0 0.0
    %703 = vmatpush1.xpose.msra.mxu0 0.0
    %704 = vmatprep.subr.mxu0 0.0
    %705 = vmatpush1.xpose.msra.mxu0 0.0
    %706 = vmatprep.subr.mxu0 0.0
    %707 = vmatpush1.xpose.msra.mxu0 0.0
    %708 = vmatprep.subr.mxu0 0.0
    %709 = vmatpush1.xpose.msra.mxu0 0.0
    %710 = vmatprep.subr.mxu0 0.0
    %711 = vmatpush1.xpose.msra.mxu0 0.0
    %712 = vmatprep.subr.mxu0 0.0
    %713 = vmatpush1.xpose.msra.mxu0 0.0
    %714 = vmatprep.subr.mxu0 0.0
    %715 = vmatpush1.xpose.msra.mxu0 0.0
    %716 = vmatprep.subr.mxu0 0.0
    %717 = vmatpush1.xpose.msra.mxu0 0.0
    %718 = vmatprep.subr.mxu0 0.0
    %719 = vmatpush1.xpose.msra.mxu0 0.0
    %720 = vmatprep.subr.mxu0 0.0
    %721 = vmatpush1.xpose.msra.mxu0 0.0
    %722 = vmatprep.subr.mxu0 0.0
    %723 = vmatpush1.xpose.msra.mxu0 0.0
    %724 = vmatprep.subr.mxu0 0.0
    %725 = vmatpush1.xpose.msra.mxu0 0.0
    %726 = vmatprep.subr.mxu0 0.0
    %727 = vmatpush1.xpose.msra.mxu0 0.0
    %728 = vmatprep.subr.mxu0 0.0
    %729 = vmatpush1.xpose.msra.mxu0 0.0
    %730 = vmatprep.subr.mxu0 0.0
    %731 = vmatpush1.xpose.msra.mxu0 0.0
    %732 = vmatprep.subr.mxu0 0.0
    %733 = vmatpush1.xpose.msra.mxu0 %v700
    %734 = vmatprep.subr.mxu0 0.0
    %735 = vmatpush2.xpose.msra.mxu0 0.0
    %736 = vmatprep.subr.mxu0 0.0
    %737 = vmatpush2.xpose.msra.mxu0 0.0
    %738 = vmatprep.subr.mxu0 0.0
    %739 = vmatpush2.xpose.msra.mxu0 0.0
    %740 = vmatprep.subr.mxu0 0.0
    %741 = vmatpush2.xpose.msra.mxu0 0.0
    %742 = vmatprep.subr.mxu0 0.0
    %743 = vmatpush2.xpose.msra.mxu0 0.0
    %744 = vmatprep.subr.mxu0 0.0
    %745 = vmatpush2.xpose.msra.mxu0 0.0
    %746 = vmatprep.subr.mxu0 0.0
    %747 = vmatpush2.xpose.msra.mxu0 0.0
    %748 = vmatprep.subr.mxu0 0.0
    %749 = vmatpush2.xpose.msra.mxu0 0.0
    %750 = vmatprep.subr.mxu0 0.0
    %751 = vmatpush2.xpose.msra.mxu0 0.0
    %752 = vmatprep.subr.mxu0 0.0
    %753 = vmatpush2.xpose.msra.mxu0 0.0
    %754 = vmatprep.subr.mxu0 0.0
    %755 = vmatpush2.xpose.msra.mxu0 0.0
    %756 = vmatprep.subr.mxu0 0.0
    %757 = vmatpush2.xpose.msra.mxu0 0.0
    %758 = vmatprep.subr.mxu0 0.0
    %759 = vmatpush2.xpose.msra.mxu0 0.0
    %760 = vmatprep.subr.mxu0 0.0
    %761 = vmatpush2.xpose.msra.mxu0 0.0
    %762 = vmatprep.subr.mxu0 0.0
    %763 = vmatpush2.xpose.msra.mxu0 0.0
    %764 = vmatprep.subr.mxu0 0.0
    %765 = vmatpush2.xpose.msra.mxu0 0.0
    %766 = vmatprep.mubr.f32.mxu0 0.0
    %767 = vmatmul.mubr.f32.gmra.mxu0 %v698
    %v768 = vpop.f32.mrf.mxu0
    %v769 = vadd.f32 0.0, %v768
    %v770 = vpop.f32.mrf.mxu0
    %771 = vdwg.mxu0
    %v772 = vsel %vm287, %v691, -inf
    %773 = vmax.xlane.f32.xlu0 %v772
    %v774 = vpop.xlane.xlu0 %773
    %v775 = vsel %vm287, %v769, -inf
    %776 = vmax.xlane.f32.xlu0 %v775
    %v777 = vpop.xlane.xlu0 %776
    %v778 = vsub.f32 %v691, %v774
    %v779 = vsub.f32 %v769, %v777
    %v780 = vmul.f32 %v778, 1.442695
    %v781 = vpow.pop %v780
    %v782 = vmul.f32 %v779, 1.442695
    %v783 = vpow.pop %v782
    %v784 = vsel %vm287, %v781, 0.0
    %785 = vadd.xlane.f32.xlu0 %v784
    %v786 = vpop.xlane.xlu0 %785
    %v787 = vsel %vm287, %v783, 0.0
    %788 = vadd.xlane.f32.xlu0 %v787
    %v789 = vpop.xlane.xlu0 %788
    %v790 = vrcp.pop %v786
    %v791 = vrcp.pop %v789
    %v792 = vmul.f32 %v781, %v790
    %v793 = vmul.f32 %v783, %v791
    %794 = vrot.lane.b32.xlu0 %v279, 88
    %v795 = vpop.permute.xlu0 %794
    %v798 = vsel %vm287, %v792, 0
    %800 = vmatprep.subr.mxu0 0.0
    %801 = vmatpush1.msra.mxu0 0.0
    %802 = vmatprep.subr.mxu0 0.0
    %803 = vmatpush1.msra.mxu0 0.0
    %804 = vmatprep.subr.mxu0 0.0
    %805 = vmatpush1.msra.mxu0 0.0
    %806 = vmatprep.subr.mxu0 0.0
    %807 = vmatpush1.msra.mxu0 0.0
    %808 = vmatprep.subr.mxu0 0.0
    %809 = vmatpush1.msra.mxu0 0.0
    %810 = vmatprep.subr.mxu0 0.0
    %811 = vmatpush1.msra.mxu0 0.0
    %812 = vmatprep.subr.mxu0 0.0
    %813 = vmatpush1.msra.mxu0 0.0
    %814 = vmatprep.subr.mxu0 0.0
    %815 = vmatpush1.msra.mxu0 0.0
    %816 = vmatprep.subr.mxu0 0.0
    %817 = vmatpush1.msra.mxu0 0.0
    %818 = vmatprep.subr.mxu0 0.0
    %819 = vmatpush1.msra.mxu0 0.0
    %820 = vmatprep.subr.mxu0 0.0
    %821 = vmatpush1.msra.mxu0 0.0
    %822 = vmatprep.subr.mxu0 0.0
    %823 = vmatpush1.msra.mxu0 0.0
    %824 = vmatprep.subr.mxu0 0.0
    %825 = vmatpush1.msra.mxu0 0.0
    %826 = vmatprep.subr.mxu0 0.0
    %827 = vmatpush1.msra.mxu0 0.0
    %828 = vmatprep.subr.mxu0 0.0
    %829 = vmatpush1.msra.mxu0 0.0
    %830 = vmatprep.subr.mxu0 0.0
    %831 = vmatpush1.msra.mxu0 %v795
    %832 = vmatprep.subr.mxu0 0.0
    %833 = vmatpush2.msra.mxu0 0.0
    %834 = vmatprep.subr.mxu0 0.0
    %835 = vmatpush2.msra.mxu0 0.0
    %836 = vmatprep.subr.mxu0 0.0
    %837 = vmatpush2.msra.mxu0 0.0
    %838 = vmatprep.subr.mxu0 0.0
    %839 = vmatpush2.msra.mxu0 0.0
    %840 = vmatprep.subr.mxu0 0.0
    %841 = vmatpush2.msra.mxu0 0.0
    %842 = vmatprep.subr.mxu0 0.0
    %843 = vmatpush2.msra.mxu0 0.0
    %844 = vmatprep.subr.mxu0 0.0
    %845 = vmatpush2.msra.mxu0 0.0
    %846 = vmatprep.subr.mxu0 0.0
    %847 = vmatpush2.msra.mxu0 0.0
    %848 = vmatprep.subr.mxu0 0.0
    %849 = vmatpush2.msra.mxu0 0.0
    %850 = vmatprep.subr.mxu0 0.0
    %851 = vmatpush2.msra.mxu0 0.0
    %852 = vmatprep.subr.mxu0 0.0
    %853 = vmatpush2.msra.mxu0 0.0
    %854 = vmatprep.subr.mxu0 0.0
    %855 = vmatpush2.msra.mxu0 0.0
    %856 = vmatprep.subr.mxu0 0.0
    %857 = vmatpush2.msra.mxu0 0.0
    %858 = vmatprep.subr.mxu0 0.0
    %859 = vmatpush2.msra.mxu0 0.0
    %860 = vmatprep.subr.mxu0 0.0
    %861 = vmatpush2.msra.mxu0 0.0
    %862 = vmatprep.subr.mxu0 0.0
    %863 = vmatpush2.msra.mxu0 0.0
    %864 = vmatprep.mubr.f32.mxu0 0.0
    %865 = vmatmul.mubr.f32.gmra.mxu0 %v798
    %v866 = vpop.f32.mrf.mxu0
    %v867 = vadd.f32 0.0, %v866
    %v868 = vpop.f32.mrf.mxu0
    %869 = vdwg.mxu0
    %870 = vrot.lane.b32.xlu0 %v284, 88
    %v871 = vpop.permute.xlu0 %870
    %v874 = vsel %vm287, %v793, 0
    %876 = vmatprep.subr.mxu0 0.0
    %877 = vmatpush1.msra.mxu0 0.0
    %878 = vmatprep.subr.mxu0 0.0
    %879 = vmatpush1.msra.mxu0 0.0
    %880 = vmatprep.subr.mxu0 0.0
    %881 = vmatpush1.msra.mxu0 0.0
    %882 = vmatprep.subr.mxu0 0.0
    %883 = vmatpush1.msra.mxu0 0.0
    %884 = vmatprep.subr.mxu0 0.0
    %885 = vmatpush1.msra.mxu0 0.0
    %886 = vmatprep.subr.mxu0 0.0
    %887 = vmatpush1.msra.mxu0 0.0
    %888 = vmatprep.subr.mxu0 0.0
    %889 = vmatpush1.msra.mxu0 0.0
    %890 = vmatprep.subr.mxu0 0.0
    %891 = vmatpush1.msra.mxu0 0.0
    %892 = vmatprep.subr.mxu0 0.0
    %893 = vmatpush1.msra.mxu0 0.0
    %894 = vmatprep.subr.mxu0 0.0
    %895 = vmatpush1.msra.mxu0 0.0
    %896 = vmatprep.subr.mxu0 0.0
    %897 = vmatpush1.msra.mxu0 0.0
    %898 = vmatprep.subr.mxu0 0.0
    %899 = vmatpush1.msra.mxu0 0.0
    %900 = vmatprep.subr.mxu0 0.0
    %901 = vmatpush1.msra.mxu0 0.0
    %902 = vmatprep.subr.mxu0 0.0
    %903 = vmatpush1.msra.mxu0 0.0
    %904 = vmatprep.subr.mxu0 0.0
    %905 = vmatpush1.msra.mxu0 0.0
    %906 = vmatprep.subr.mxu0 0.0
    %907 = vmatpush1.msra.mxu0 %v871
    %908 = vmatprep.subr.mxu0 0.0
    %909 = vmatpush2.msra.mxu0 0.0
    %910 = vmatprep.subr.mxu0 0.0
    %911 = vmatpush2.msra.mxu0 0.0
    %912 = vmatprep.subr.mxu0 0.0
    %913 = vmatpush2.msra.mxu0 0.0
    %914 = vmatprep.subr.mxu0 0.0
    %915 = vmatpush2.msra.mxu0 0.0
    %916 = vmatprep.subr.mxu0 0.0
    %917 = vmatpush2.msra.mxu0 0.0
    %918 = vmatprep.subr.mxu0 0.0
    %919 = vmatpush2.msra.mxu0 0.0
    %920 = vmatprep.subr.mxu0 0.0
    %921 = vmatpush2.msra.mxu0 0.0
    %922 = vmatprep.subr.mxu0 0.0
    %923 = vmatpush2.msra.mxu0 0.0
    %924 = vmatprep.subr.mxu0 0.0
    %925 = vmatpush2.msra.mxu0 0.0
    %926 = vmatprep.subr.mxu0 0.0
    %927 = vmatpush2.msra.mxu0 0.0
    %928 = vmatprep.subr.mxu0 0.0
    %929 = vmatpush2.msra.mxu0 0.0
    %930 = vmatprep.subr.mxu0 0.0
    %931 = vmatpush2.msra.mxu0 0.0
    %932 = vmatprep.subr.mxu0 0.0
    %933 = vmatpush2.msra.mxu0 0.0
    %934 = vmatprep.subr.mxu0 0.0
    %935 = vmatpush2.msra.mxu0 0.0
    %936 = vmatprep.subr.mxu0 0.0
    %937 = vmatpush2.msra.mxu0 0.0
    %938 = vmatprep.subr.mxu0 0.0
    %939 = vmatpush2.msra.mxu0 0.0
    %940 = vmatprep.mubr.f32.mxu0 0.0
    %941 = vmatmul.mubr.f32.gmra.mxu0 %v874
    %v942 = vpop.f32.mrf.mxu0
    %v943 = vadd.f32 0.0, %v942
    %v944 = vpop.f32.mrf.mxu0
    %945 = vdwg.mxu0
    %948 = vrot.lane.b32.xlu0 %v867, 8
    %v949 = vpop.permute.xlu0 %948
    %950 = vrot.lane.b32.xlu0 %v943, 8
    %v951 = vpop.permute.xlu0 %950
    %vm954 = vcmask 130112
    %955 = vst.msk [vmem:[#allocation2] sm:$0xff] %vm954, %v949
    %956 = vst.msk [vmem:[#allocation2 + $0x8] sm:$0xff] %vm954, %v951
    %957 = vrot.lane.b32.xlu0 %v185, 112
    %v958 = vpop.permute.xlu0 %957
    %959 = vrot.lane.b32.xlu0 %v279, 112
    %v960 = vpop.permute.xlu0 %959
    %v961 = vsel %vm287, %v958, 0
    %v963 = vsel %vm287, %v960, 0
    %965 = vmatprep.subr.mxu0 0.0
    %966 = vmatpush1.xpose.msra.mxu0 0.0
    %967 = vmatprep.subr.mxu0 0.0
    %968 = vmatpush1.xpose.msra.mxu0 0.0
    %969 = vmatprep.subr.mxu0 0.0
    %970 = vmatpush1.xpose.msra.mxu0 0.0
    %971 = vmatprep.subr.mxu0 0.0
    %972 = vmatpush1.xpose.msra.mxu0 0.0
    %973 = vmatprep.subr.mxu0 0.0
    %974 = vmatpush1.xpose.msra.mxu0 0.0
    %975 = vmatprep.subr.mxu0 0.0
    %976 = vmatpush1.xpose.msra.mxu0 0.0
    %977 = vmatprep.subr.mxu0 0.0
    %978 = vmatpush1.xpose.msra.mxu0 0.0
    %979 = vmatprep.subr.mxu0 0.0
    %980 = vmatpush1.xpose.msra.mxu0 0.0
    %981 = vmatprep.subr.mxu0 0.0
    %982 = vmatpush1.xpose.msra.mxu0 0.0
    %983 = vmatprep.subr.mxu0 0.0
    %984 = vmatpush1.xpose.msra.mxu0 0.0
    %985 = vmatprep.subr.mxu0 0.0
    %986 = vmatpush1.xpose.msra.mxu0 0.0
    %987 = vmatprep.subr.mxu0 0.0
    %988 = vmatpush1.xpose.msra.mxu0 0.0
    %989 = vmatprep.subr.mxu0 0.0
    %990 = vmatpush1.xpose.msra.mxu0 0.0
    %991 = vmatprep.subr.mxu0 0.0
    %992 = vmatpush1.xpose.msra.mxu0 0.0
    %993 = vmatprep.subr.mxu0 0.0
    %994 = vmatpush1.xpose.msra.mxu0 0.0
    %995 = vmatprep.subr.mxu0 0.0
    %996 = vmatpush1.xpose.msra.mxu0 %v963
    %997 = vmatprep.subr.mxu0 0.0
    %998 = vmatpush2.xpose.msra.mxu0 0.0
    %999 = vmatprep.subr.mxu0 0.0
    %1000 = vmatpush2.xpose.msra.mxu0 0.0
    %1001 = vmatprep.subr.mxu0 0.0
    %1002 = vmatpush2.xpose.msra.mxu0 0.0
    %1003 = vmatprep.subr.mxu0 0.0
    %1004 = vmatpush2.xpose.msra.mxu0 0.0
    %1005 = vmatprep.subr.mxu0 0.0
    %1006 = vmatpush2.xpose.msra.mxu0 0.0
    %1007 = vmatprep.subr.mxu0 0.0
    %1008 = vmatpush2.xpose.msra.mxu0 0.0
    %1009 = vmatprep.subr.mxu0 0.0
    %1010 = vmatpush2.xpose.msra.mxu0 0.0
    %1011 = vmatprep.subr.mxu0 0.0
    %1012 = vmatpush2.xpose.msra.mxu0 0.0
    %1013 = vmatprep.subr.mxu0 0.0
    %1014 = vmatpush2.xpose.msra.mxu0 0.0
    %1015 = vmatprep.subr.mxu0 0.0
    %1016 = vmatpush2.xpose.msra.mxu0 0.0
    %1017 = vmatprep.subr.mxu0 0.0
    %1018 = vmatpush2.xpose.msra.mxu0 0.0
    %1019 = vmatprep.subr.mxu0 0.0
    %1020 = vmatpush2.xpose.msra.mxu0 0.0
    %1021 = vmatprep.subr.mxu0 0.0
    %1022 = vmatpush2.xpose.msra.mxu0 0.0
    %1023 = vmatprep.subr.mxu0 0.0
    %1024 = vmatpush2.xpose.msra.mxu0 0.0
    %1025 = vmatprep.subr.mxu0 0.0
    %1026 = vmatpush2.xpose.msra.mxu0 0.0
    %1027 = vmatprep.subr.mxu0 0.0
    %1028 = vmatpush2.xpose.msra.mxu0 0.0
    %1029 = vmatprep.mubr.f32.mxu0 0.0
    %1030 = vmatmul.mubr.f32.gmra.mxu0 %v961
    %v1031 = vpop.f32.mrf.mxu0
    %v1032 = vadd.f32 0.0, %v1031
    %v1033 = vpop.f32.mrf.mxu0
    %1034 = vdwg.mxu0
    %1035 = vrot.lane.b32.xlu0 %v190, 112
    %v1036 = vpop.permute.xlu0 %1035
    %1037 = vrot.lane.b32.xlu0 %v284, 112
    %v1038 = vpop.permute.xlu0 %1037
    %v1039 = vsel %vm287, %v1036, 0
    %v1041 = vsel %vm287, %v1038, 0
    %1043 = vmatprep.subr.mxu0 0.0
    %1044 = vmatpush1.xpose.msra.mxu0 0.0
    %1045 = vmatprep.subr.mxu0 0.0
    %1046 = vmatpush1.xpose.msra.mxu0 0.0
    %1047 = vmatprep.subr.mxu0 0.0
    %1048 = vmatpush1.xpose.msra.mxu0 0.0
    %1049 = vmatprep.subr.mxu0 0.0
    %1050 = vmatpush1.xpose.msra.mxu0 0.0
    %1051 = vmatprep.subr.mxu0 0.0
    %1052 = vmatpush1.xpose.msra.mxu0 0.0
    %1053 = vmatprep.subr.mxu0 0.0
    %1054 = vmatpush1.xpose.msra.mxu0 0.0
    %1055 = vmatprep.subr.mxu0 0.0
    %1056 = vmatpush1.xpose.msra.mxu0 0.0
    %1057 = vmatprep.subr.mxu0 0.0
    %1058 = vmatpush1.xpose.msra.mxu0 0.0
    %1059 = vmatprep.subr.mxu0 0.0
    %1060 = vmatpush1.xpose.msra.mxu0 0.0
    %1061 = vmatprep.subr.mxu0 0.0
    %1062 = vmatpush1.xpose.msra.mxu0 0.0
    %1063 = vmatprep.subr.mxu0 0.0
    %1064 = vmatpush1.xpose.msra.mxu0 0.0
    %1065 = vmatprep.subr.mxu0 0.0
    %1066 = vmatpush1.xpose.msra.mxu0 0.0
    %1067 = vmatprep.subr.mxu0 0.0
    %1068 = vmatpush1.xpose.msra.mxu0 0.0
    %1069 = vmatprep.subr.mxu0 0.0
    %1070 = vmatpush1.xpose.msra.mxu0 0.0
    %1071 = vmatprep.subr.mxu0 0.0
    %1072 = vmatpush1.xpose.msra.mxu0 0.0
    %1073 = vmatprep.subr.mxu0 0.0
    %1074 = vmatpush1.xpose.msra.mxu0 %v1041
    %1075 = vmatprep.subr.mxu0 0.0
    %1076 = vmatpush2.xpose.msra.mxu0 0.0
    %1077 = vmatprep.subr.mxu0 0.0
    %1078 = vmatpush2.xpose.msra.mxu0 0.0
    %1079 = vmatprep.subr.mxu0 0.0
    %1080 = vmatpush2.xpose.msra.mxu0 0.0
    %1081 = vmatprep.subr.mxu0 0.0
    %1082 = vmatpush2.xpose.msra.mxu0 0.0
    %1083 = vmatprep.subr.mxu0 0.0
    %1084 = vmatpush2.xpose.msra.mxu0 0.0
    %1085 = vmatprep.subr.mxu0 0.0
    %1086 = vmatpush2.xpose.msra.mxu0 0.0
    %1087 = vmatprep.subr.mxu0 0.0
    %1088 = vmatpush2.xpose.msra.mxu0 0.0
    %1089 = vmatprep.subr.mxu0 0.0
    %1090 = vmatpush2.xpose.msra.mxu0 0.0
    %1091 = vmatprep.subr.mxu0 0.0
    %1092 = vmatpush2.xpose.msra.mxu0 0.0
    %1093 = vmatprep.subr.mxu0 0.0
    %1094 = vmatpush2.xpose.msra.mxu0 0.0
    %1095 = vmatprep.subr.mxu0 0.0
    %1096 = vmatpush2.xpose.msra.mxu0 0.0
    %1097 = vmatprep.subr.mxu0 0.0
    %1098 = vmatpush2.xpose.msra.mxu0 0.0
    %1099 = vmatprep.subr.mxu0 0.0
    %1100 = vmatpush2.xpose.msra.mxu0 0.0
    %1101 = vmatprep.subr.mxu0 0.0
    %1102 = vmatpush2.xpose.msra.mxu0 0.0
    %1103 = vmatprep.subr.mxu0 0.0
    %1104 = vmatpush2.xpose.msra.mxu0 0.0
    %1105 = vmatprep.subr.mxu0 0.0
    %1106 = vmatpush2.xpose.msra.mxu0 0.0
    %1107 = vmatprep.mubr.f32.mxu0 0.0
    %1108 = vmatmul.mubr.f32.gmra.mxu0 %v1039
    %v1109 = vpop.f32.mrf.mxu0
    %v1110 = vadd.f32 0.0, %v1109
    %v1111 = vpop.f32.mrf.mxu0
    %1112 = vdwg.mxu0
    %v1113 = vsel %vm287, %v1032, -inf
    %1114 = vmax.xlane.f32.xlu0 %v1113
    %v1115 = vpop.xlane.xlu0 %1114
    %v1116 = vsel %vm287, %v1110, -inf
    %1117 = vmax.xlane.f32.xlu0 %v1116
    %v1118 = vpop.xlane.xlu0 %1117
    %v1119 = vsub.f32 %v1032, %v1115
    %v1120 = vsub.f32 %v1110, %v1118
    %v1121 = vmul.f32 %v1119, 1.442695
    %v1122 = vpow.pop %v1121
    %v1123 = vmul.f32 %v1120, 1.442695
    %v1124 = vpow.pop %v1123
    %v1125 = vsel %vm287, %v1122, 0.0
    %1126 = vadd.xlane.f32.xlu0 %v1125
    %v1127 = vpop.xlane.xlu0 %1126
    %v1128 = vsel %vm287, %v1124, 0.0
    %1129 = vadd.xlane.f32.xlu0 %v1128
    %v1130 = vpop.xlane.xlu0 %1129
    %v1131 = vrcp.pop %v1127
    %v1132 = vrcp.pop %v1130
    %v1133 = vmul.f32 %v1122, %v1131
    %v1134 = vmul.f32 %v1124, %v1132
    %1135 = vrot.lane.b32.xlu0 %v279, 80
    %v1136 = vpop.permute.xlu0 %1135
    %v1139 = vsel %vm287, %v1133, 0
    %1141 = vmatprep.subr.mxu0 0.0
    %1142 = vmatpush1.msra.mxu0 0.0
    %1143 = vmatprep.subr.mxu0 0.0
    %1144 = vmatpush1.msra.mxu0 0.0
    %1145 = vmatprep.subr.mxu0 0.0
    %1146 = vmatpush1.msra.mxu0 0.0
    %1147 = vmatprep.subr.mxu0 0.0
    %1148 = vmatpush1.msra.mxu0 0.0
    %1149 = vmatprep.subr.mxu0 0.0
    %1150 = vmatpush1.msra.mxu0 0.0
    %1151 = vmatprep.subr.mxu0 0.0
    %1152 = vmatpush1.msra.mxu0 0.0
    %1153 = vmatprep.subr.mxu0 0.0
    %1154 = vmatpush1.msra.mxu0 0.0
    %1155 = vmatprep.subr.mxu0 0.0
    %1156 = vmatpush1.msra.mxu0 0.0
    %1157 = vmatprep.subr.mxu0 0.0
    %1158 = vmatpush1.msra.mxu0 0.0
    %1159 = vmatprep.subr.mxu0 0.0
    %1160 = vmatpush1.msra.mxu0 0.0
    %1161 = vmatprep.subr.mxu0 0.0
    %1162 = vmatpush1.msra.mxu0 0.0
    %1163 = vmatprep.subr.mxu0 0.0
    %1164 = vmatpush1.msra.mxu0 0.0
    %1165 = vmatprep.subr.mxu0 0.0
    %1166 = vmatpush1.msra.mxu0 0.0
    %1167 = vmatprep.subr.mxu0 0.0
    %1168 = vmatpush1.msra.mxu0 0.0
    %1169 = vmatprep.subr.mxu0 0.0
    %1170 = vmatpush1.msra.mxu0 0.0
    %1171 = vmatprep.subr.mxu0 0.0
    %1172 = vmatpush1.msra.mxu0 %v1136
    %1173 = vmatprep.subr.mxu0 0.0
    %1174 = vmatpush2.msra.mxu0 0.0
    %1175 = vmatprep.subr.mxu0 0.0
    %1176 = vmatpush2.msra.mxu0 0.0
    %1177 = vmatprep.subr.mxu0 0.0
    %1178 = vmatpush2.msra.mxu0 0.0
    %1179 = vmatprep.subr.mxu0 0.0
    %1180 = vmatpush2.msra.mxu0 0.0
    %1181 = vmatprep.subr.mxu0 0.0
    %1182 = vmatpush2.msra.mxu0 0.0
    %1183 = vmatprep.subr.mxu0 0.0
    %1184 = vmatpush2.msra.mxu0 0.0
    %1185 = vmatprep.subr.mxu0 0.0
    %1186 = vmatpush2.msra.mxu0 0.0
    %1187 = vmatprep.subr.mxu0 0.0
    %1188 = vmatpush2.msra.mxu0 0.0
    %1189 = vmatprep.subr.mxu0 0.0
    %1190 = vmatpush2.msra.mxu0 0.0
    %1191 = vmatprep.subr.mxu0 0.0
    %1192 = vmatpush2.msra.mxu0 0.0
    %1193 = vmatprep.subr.mxu0 0.0
    %1194 = vmatpush2.msra.mxu0 0.0
    %1195 = vmatprep.subr.mxu0 0.0
    %1196 = vmatpush2.msra.mxu0 0.0
    %1197 = vmatprep.subr.mxu0 0.0
    %1198 = vmatpush2.msra.mxu0 0.0
    %1199 = vmatprep.subr.mxu0 0.0
    %1200 = vmatpush2.msra.mxu0 0.0
    %1201 = vmatprep.subr.mxu0 0.0
    %1202 = vmatpush2.msra.mxu0 0.0
    %1203 = vmatprep.subr.mxu0 0.0
    %1204 = vmatpush2.msra.mxu0 0.0
    %1205 = vmatprep.mubr.f32.mxu0 0.0
    %1206 = vmatmul.mubr.f32.gmra.mxu0 %v1139
    %v1207 = vpop.f32.mrf.mxu0
    %v1208 = vadd.f32 0.0, %v1207
    %v1209 = vpop.f32.mrf.mxu0
    %1210 = vdwg.mxu0
    %1211 = vrot.lane.b32.xlu0 %v284, 80
    %v1212 = vpop.permute.xlu0 %1211
    %v1215 = vsel %vm287, %v1134, 0
    %1217 = vmatprep.subr.mxu0 0.0
    %1218 = vmatpush1.msra.mxu0 0.0
    %1219 = vmatprep.subr.mxu0 0.0
    %1220 = vmatpush1.msra.mxu0 0.0
    %1221 = vmatprep.subr.mxu0 0.0
    %1222 = vmatpush1.msra.mxu0 0.0
    %1223 = vmatprep.subr.mxu0 0.0
    %1224 = vmatpush1.msra.mxu0 0.0
    %1225 = vmatprep.subr.mxu0 0.0
    %1226 = vmatpush1.msra.mxu0 0.0
    %1227 = vmatprep.subr.mxu0 0.0
    %1228 = vmatpush1.msra.mxu0 0.0
    %1229 = vmatprep.subr.mxu0 0.0
    %1230 = vmatpush1.msra.mxu0 0.0
    %1231 = vmatprep.subr.mxu0 0.0
    %1232 = vmatpush1.msra.mxu0 0.0
    %1233 = vmatprep.subr.mxu0 0.0
    %1234 = vmatpush1.msra.mxu0 0.0
    %1235 = vmatprep.subr.mxu0 0.0
    %1236 = vmatpush1.msra.mxu0 0.0
    %1237 = vmatprep.subr.mxu0 0.0
    %1238 = vmatpush1.msra.mxu0 0.0
    %1239 = vmatprep.subr.mxu0 0.0
    %1240 = vmatpush1.msra.mxu0 0.0
    %1241 = vmatprep.subr.mxu0 0.0
    %1242 = vmatpush1.msra.mxu0 0.0
    %1243 = vmatprep.subr.mxu0 0.0
    %1244 = vmatpush1.msra.mxu0 0.0
    %1245 = vmatprep.subr.mxu0 0.0
    %1246 = vmatpush1.msra.mxu0 0.0
    %1247 = vmatprep.subr.mxu0 0.0
    %1248 = vmatpush1.msra.mxu0 %v1212
    %1249 = vmatprep.subr.mxu0 0.0
    %1250 = vmatpush2.msra.mxu0 0.0
    %1251 = vmatprep.subr.mxu0 0.0
    %1252 = vmatpush2.msra.mxu0 0.0
    %1253 = vmatprep.subr.mxu0 0.0
    %1254 = vmatpush2.msra.mxu0 0.0
    %1255 = vmatprep.subr.mxu0 0.0
    %1256 = vmatpush2.msra.mxu0 0.0
    %1257 = vmatprep.subr.mxu0 0.0
    %1258 = vmatpush2.msra.mxu0 0.0
    %1259 = vmatprep.subr.mxu0 0.0
    %1260 = vmatpush2.msra.mxu0 0.0
    %1261 = vmatprep.subr.mxu0 0.0
    %1262 = vmatpush2.msra.mxu0 0.0
    %1263 = vmatprep.subr.mxu0 0.0
    %1264 = vmatpush2.msra.mxu0 0.0
    %1265 = vmatprep.subr.mxu0 0.0
    %1266 = vmatpush2.msra.mxu0 0.0
    %1267 = vmatprep.subr.mxu0 0.0
    %1268 = vmatpush2.msra.mxu0 0.0
    %1269 = vmatprep.subr.mxu0 0.0
    %1270 = vmatpush2.msra.mxu0 0.0
    %1271 = vmatprep.subr.mxu0 0.0
    %1272 = vmatpush2.msra.mxu0 0.0
    %1273 = vmatprep.subr.mxu0 0.0
    %1274 = vmatpush2.msra.mxu0 0.0
    %1275 = vmatprep.subr.mxu0 0.0
    %1276 = vmatpush2.msra.mxu0 0.0
    %1277 = vmatprep.subr.mxu0 0.0
    %1278 = vmatpush2.msra.mxu0 0.0
    %1279 = vmatprep.subr.mxu0 0.0
    %1280 = vmatpush2.msra.mxu0 0.0
    %1281 = vmatprep.mubr.f32.mxu0 0.0
    %1282 = vmatmul.mubr.f32.gmra.mxu0 %v1215
    %v1283 = vpop.f32.mrf.mxu0
    %v1284 = vadd.f32 0.0, %v1283
    %v1285 = vpop.f32.mrf.mxu0
    %1286 = vdwg.mxu0
    %1289 = vrot.lane.b32.xlu0 %v1208, 16
    %v1290 = vpop.permute.xlu0 %1289
    %1291 = vrot.lane.b32.xlu0 %v1284, 16
    %v1292 = vpop.permute.xlu0 %1291
    %vm1295 = vcmask 195712
    %1296 = vst.msk [vmem:[#allocation2] sm:$0xff] %vm1295, %v1290
    %1297 = vst.msk [vmem:[#allocation2 + $0x8] sm:$0xff] %vm1295, %v1292
    %1298 = vrot.lane.b32.xlu0 %v185, 104
    %v1299 = vpop.permute.xlu0 %1298
    %1300 = vrot.lane.b32.xlu0 %v279, 104
    %v1301 = vpop.permute.xlu0 %1300
    %v1302 = vsel %vm287, %v1299, 0
    %v1304 = vsel %vm287, %v1301, 0
    %1306 = vmatprep.subr.mxu0 0.0
    %1307 = vmatpush1.xpose.msra.mxu0 0.0
    %1308 = vmatprep.subr.mxu0 0.0
    %1309 = vmatpush1.xpose.msra.mxu0 0.0
    %1310 = vmatprep.subr.mxu0 0.0
    %1311 = vmatpush1.xpose.msra.mxu0 0.0
    %1312 = vmatprep.subr.mxu0 0.0
    %1313 = vmatpush1.xpose.msra.mxu0 0.0
    %1314 = vmatprep.subr.mxu0 0.0
    %1315 = vmatpush1.xpose.msra.mxu0 0.0
    %1316 = vmatprep.subr.mxu0 0.0
    %1317 = vmatpush1.xpose.msra.mxu0 0.0
    %1318 = vmatprep.subr.mxu0 0.0
    %1319 = vmatpush1.xpose.msra.mxu0 0.0
    %1320 = vmatprep.subr.mxu0 0.0
    %1321 = vmatpush1.xpose.msra.mxu0 0.0
    %1322 = vmatprep.subr.mxu0 0.0
    %1323 = vmatpush1.xpose.msra.mxu0 0.0
    %1324 = vmatprep.subr.mxu0 0.0
    %1325 = vmatpush1.xpose.msra.mxu0 0.0
    %1326 = vmatprep.subr.mxu0 0.0
    %1327 = vmatpush1.xpose.msra.mxu0 0.0
    %1328 = vmatprep.subr.mxu0 0.0
    %1329 = vmatpush1.xpose.msra.mxu0 0.0
    %1330 = vmatprep.subr.mxu0 0.0
    %1331 = vmatpush1.xpose.msra.mxu0 0.0
    %1332 = vmatprep.subr.mxu0 0.0
    %1333 = vmatpush1.xpose.msra.mxu0 0.0
    %1334 = vmatprep.subr.mxu0 0.0
    %1335 = vmatpush1.xpose.msra.mxu0 0.0
    %1336 = vmatprep.subr.mxu0 0.0
    %1337 = vmatpush1.xpose.msra.mxu0 %v1304
    %1338 = vmatprep.subr.mxu0 0.0
    %1339 = vmatpush2.xpose.msra.mxu0 0.0
    %1340 = vmatprep.subr.mxu0 0.0
    %1341 = vmatpush2.xpose.msra.mxu0 0.0
    %1342 = vmatprep.subr.mxu0 0.0
    %1343 = vmatpush2.xpose.msra.mxu0 0.0
    %1344 = vmatprep.subr.mxu0 0.0
    %1345 = vmatpush2.xpose.msra.mxu0 0.0
    %1346 = vmatprep.subr.mxu0 0.0
    %1347 = vmatpush2.xpose.msra.mxu0 0.0
    %1348 = vmatprep.subr.mxu0 0.0
    %1349 = vmatpush2.xpose.msra.mxu0 0.0
    %1350 = vmatprep.subr.mxu0 0.0
    %1351 = vmatpush2.xpose.msra.mxu0 0.0
    %1352 = vmatprep.subr.mxu0 0.0
    %1353 = vmatpush2.xpose.msra.mxu0 0.0
    %1354 = vmatprep.subr.mxu0 0.0
    %1355 = vmatpush2.xpose.msra.mxu0 0.0
    %1356 = vmatprep.subr.mxu0 0.0
    %1357 = vmatpush2.xpose.msra.mxu0 0.0
    %1358 = vmatprep.subr.mxu0 0.0
    %1359 = vmatpush2.xpose.msra.mxu0 0.0
    %1360 = vmatprep.subr.mxu0 0.0
    %1361 = vmatpush2.xpose.msra.mxu0 0.0
    %1362 = vmatprep.subr.mxu0 0.0
    %1363 = vmatpush2.xpose.msra.mxu0 0.0
    %1364 = vmatprep.subr.mxu0 0.0
    %1365 = vmatpush2.xpose.msra.mxu0 0.0
    %1366 = vmatprep.subr.mxu0 0.0
    %1367 = vmatpush2.xpose.msra.mxu0 0.0
    %1368 = vmatprep.subr.mxu0 0.0
    %1369 = vmatpush2.xpose.msra.mxu0 0.0
    %1370 = vmatprep.mubr.f32.mxu0 0.0
    %1371 = vmatmul.mubr.f32.gmra.mxu0 %v1302
    %v1372 = vpop.f32.mrf.mxu0
    %v1373 = vadd.f32 0.0, %v1372
    %v1374 = vpop.f32.mrf.mxu0
    %1375 = vdwg.mxu0
    %1376 = vrot.lane.b32.xlu0 %v190, 104
    %v1377 = vpop.permute.xlu0 %1376
    %1378 = vrot.lane.b32.xlu0 %v284, 104
    %v1379 = vpop.permute.xlu0 %1378
    %v1380 = vsel %vm287, %v1377, 0
    %v1382 = vsel %vm287, %v1379, 0
    %1384 = vmatprep.subr.mxu0 0.0
    %1385 = vmatpush1.xpose.msra.mxu0 0.0
    %1386 = vmatprep.subr.mxu0 0.0
    %1387 = vmatpush1.xpose.msra.mxu0 0.0
    %1388 = vmatprep.subr.mxu0 0.0
    %1389 = vmatpush1.xpose.msra.mxu0 0.0
    %1390 = vmatprep.subr.mxu0 0.0
    %1391 = vmatpush1.xpose.msra.mxu0 0.0
    %1392 = vmatprep.subr.mxu0 0.0
    %1393 = vmatpush1.xpose.msra.mxu0 0.0
    %1394 = vmatprep.subr.mxu0 0.0
    %1395 = vmatpush1.xpose.msra.mxu0 0.0
    %1396 = vmatprep.subr.mxu0 0.0
    %1397 = vmatpush1.xpose.msra.mxu0 0.0
    %1398 = vmatprep.subr.mxu0 0.0
    %1399 = vmatpush1.xpose.msra.mxu0 0.0
    %1400 = vmatprep.subr.mxu0 0.0
    %1401 = vmatpush1.xpose.msra.mxu0 0.0
    %1402 = vmatprep.subr.mxu0 0.0
    %1403 = vmatpush1.xpose.msra.mxu0 0.0
    %1404 = vmatprep.subr.mxu0 0.0
    %1405 = vmatpush1.xpose.msra.mxu0 0.0
    %1406 = vmatprep.subr.mxu0 0.0
    %1407 = vmatpush1.xpose.msra.mxu0 0.0
    %1408 = vmatprep.subr.mxu0 0.0
    %1409 = vmatpush1.xpose.msra.mxu0 0.0
    %1410 = vmatprep.subr.mxu0 0.0
    %1411 = vmatpush1.xpose.msra.mxu0 0.0
    %1412 = vmatprep.subr.mxu0 0.0
    %1413 = vmatpush1.xpose.msra.mxu0 0.0
    %1414 = vmatprep.subr.mxu0 0.0
    %1415 = vmatpush1.xpose.msra.mxu0 %v1382
    %1416 = vmatprep.subr.mxu0 0.0
    %1417 = vmatpush2.xpose.msra.mxu0 0.0
    %1418 = vmatprep.subr.mxu0 0.0
    %1419 = vmatpush2.xpose.msra.mxu0 0.0
    %1420 = vmatprep.subr.mxu0 0.0
    %1421 = vmatpush2.xpose.msra.mxu0 0.0
    %1422 = vmatprep.subr.mxu0 0.0
    %1423 = vmatpush2.xpose.msra.mxu0 0.0
    %1424 = vmatprep.subr.mxu0 0.0
    %1425 = vmatpush2.xpose.msra.mxu0 0.0
    %1426 = vmatprep.subr.mxu0 0.0
    %1427 = vmatpush2.xpose.msra.mxu0 0.0
    %1428 = vmatprep.subr.mxu0 0.0
    %1429 = vmatpush2.xpose.msra.mxu0 0.0
    %1430 = vmatprep.subr.mxu0 0.0
    %1431 = vmatpush2.xpose.msra.mxu0 0.0
    %1432 = vmatprep.subr.mxu0 0.0
    %1433 = vmatpush2.xpose.msra.mxu0 0.0
    %1434 = vmatprep.subr.mxu0 0.0
    %1435 = vmatpush2.xpose.msra.mxu0 0.0
    %1436 = vmatprep.subr.mxu0 0.0
    %1437 = vmatpush2.xpose.msra.mxu0 0.0
    %1438 = vmatprep.subr.mxu0 0.0
    %1439 = vmatpush2.xpose.msra.mxu0 0.0
    %1440 = vmatprep.subr.mxu0 0.0
    %1441 = vmatpush2.xpose.msra.mxu0 0.0
    %1442 = vmatprep.subr.mxu0 0.0
    %1443 = vmatpush2.xpose.msra.mxu0 0.0
    %1444 = vmatprep.subr.mxu0 0.0
    %1445 = vmatpush2.xpose.msra.mxu0 0.0
    %1446 = vmatprep.subr.mxu0 0.0
    %1447 = vmatpush2.xpose.msra.mxu0 0.0
    %1448 = vmatprep.mubr.f32.mxu0 0.0
    %1449 = vmatmul.mubr.f32.gmra.mxu0 %v1380
    %v1450 = vpop.f32.mrf.mxu0
    %v1451 = vadd.f32 0.0, %v1450
    %v1452 = vpop.f32.mrf.mxu0
    %1453 = vdwg.mxu0
    %v1454 = vsel %vm287, %v1373, -inf
    %1455 = vmax.xlane.f32.xlu0 %v1454
    %v1456 = vpop.xlane.xlu0 %1455
    %v1457 = vsel %vm287, %v1451, -inf
    %1458 = vmax.xlane.f32.xlu0 %v1457
    %v1459 = vpop.xlane.xlu0 %1458
    %v1460 = vsub.f32 %v1373, %v1456
    %v1461 = vsub.f32 %v1451, %v1459
    %v1462 = vmul.f32 %v1460, 1.442695
    %v1463 = vpow.pop %v1462
    %v1464 = vmul.f32 %v1461, 1.442695
    %v1465 = vpow.pop %v1464
    %v1466 = vsel %vm287, %v1463, 0.0
    %1467 = vadd.xlane.f32.xlu0 %v1466
    %v1468 = vpop.xlane.xlu0 %1467
    %v1469 = vsel %vm287, %v1465, 0.0
    %1470 = vadd.xlane.f32.xlu0 %v1469
    %v1471 = vpop.xlane.xlu0 %1470
    %v1472 = vrcp.pop %v1468
    %v1473 = vrcp.pop %v1471
    %v1474 = vmul.f32 %v1463, %v1472
    %v1475 = vmul.f32 %v1465, %v1473
    %1476 = vrot.lane.b32.xlu0 %v279, 72
    %v1477 = vpop.permute.xlu0 %1476
    %v1480 = vsel %vm287, %v1474, 0
    %1482 = vmatprep.subr.mxu0 0.0
    %1483 = vmatpush1.msra.mxu0 0.0
    %1484 = vmatprep.subr.mxu0 0.0
    %1485 = vmatpush1.msra.mxu0 0.0
    %1486 = vmatprep.subr.mxu0 0.0
    %1487 = vmatpush1.msra.mxu0 0.0
    %1488 = vmatprep.subr.mxu0 0.0
    %1489 = vmatpush1.msra.mxu0 0.0
    %1490 = vmatprep.subr.mxu0 0.0
    %1491 = vmatpush1.msra.mxu0 0.0
    %1492 = vmatprep.subr.mxu0 0.0
    %1493 = vmatpush1.msra.mxu0 0.0
    %1494 = vmatprep.subr.mxu0 0.0
    %1495 = vmatpush1.msra.mxu0 0.0
    %1496 = vmatprep.subr.mxu0 0.0
    %1497 = vmatpush1.msra.mxu0 0.0
    %1498 = vmatprep.subr.mxu0 0.0
    %1499 = vmatpush1.msra.mxu0 0.0
    %1500 = vmatprep.subr.mxu0 0.0
    %1501 = vmatpush1.msra.mxu0 0.0
    %1502 = vmatprep.subr.mxu0 0.0
    %1503 = vmatpush1.msra.mxu0 0.0
    %1504 = vmatprep.subr.mxu0 0.0
    %1505 = vmatpush1.msra.mxu0 0.0
    %1506 = vmatprep.subr.mxu0 0.0
    %1507 = vmatpush1.msra.mxu0 0.0
    %1508 = vmatprep.subr.mxu0 0.0
    %1509 = vmatpush1.msra.mxu0 0.0
    %1510 = vmatprep.subr.mxu0 0.0
    %1511 = vmatpush1.msra.mxu0 0.0
    %1512 = vmatprep.subr.mxu0 0.0
    %1513 = vmatpush1.msra.mxu0 %v1477
    %1514 = vmatprep.subr.mxu0 0.0
    %1515 = vmatpush2.msra.mxu0 0.0
    %1516 = vmatprep.subr.mxu0 0.0
    %1517 = vmatpush2.msra.mxu0 0.0
    %1518 = vmatprep.subr.mxu0 0.0
    %1519 = vmatpush2.msra.mxu0 0.0
    %1520 = vmatprep.subr.mxu0 0.0
    %1521 = vmatpush2.msra.mxu0 0.0
    %1522 = vmatprep.subr.mxu0 0.0
    %1523 = vmatpush2.msra.mxu0 0.0
    %1524 = vmatprep.subr.mxu0 0.0
    %1525 = vmatpush2.msra.mxu0 0.0
    %1526 = vmatprep.subr.mxu0 0.0
    %1527 = vmatpush2.msra.mxu0 0.0
    %1528 = vmatprep.subr.mxu0 0.0
    %1529 = vmatpush2.msra.mxu0 0.0
    %1530 = vmatprep.subr.mxu0 0.0
    %1531 = vmatpush2.msra.mxu0 0.0
    %1532 = vmatprep.subr.mxu0 0.0
    %1533 = vmatpush2.msra.mxu0 0.0
    %1534 = vmatprep.subr.mxu0 0.0
    %1535 = vmatpush2.msra.mxu0 0.0
    %1536 = vmatprep.subr.mxu0 0.0
    %1537 = vmatpush2.msra.mxu0 0.0
    %1538 = vmatprep.subr.mxu0 0.0
    %1539 = vmatpush2.msra.mxu0 0.0
    %1540 = vmatprep.subr.mxu0 0.0
    %1541 = vmatpush2.msra.mxu0 0.0
    %1542 = vmatprep.subr.mxu0 0.0
    %1543 = vmatpush2.msra.mxu0 0.0
    %1544 = vmatprep.subr.mxu0 0.0
    %1545 = vmatpush2.msra.mxu0 0.0
    %1546 = vmatprep.mubr.f32.mxu0 0.0
    %1547 = vmatmul.mubr.f32.gmra.mxu0 %v1480
    %v1548 = vpop.f32.mrf.mxu0
    %v1549 = vadd.f32 0.0, %v1548
    %v1550 = vpop.f32.mrf.mxu0
    %1551 = vdwg.mxu0
    %1552 = vrot.lane.b32.xlu0 %v284, 72
    %v1553 = vpop.permute.xlu0 %1552
    %v1556 = vsel %vm287, %v1475, 0
    %1558 = vmatprep.subr.mxu0 0.0
    %1559 = vmatpush1.msra.mxu0 0.0
    %1560 = vmatprep.subr.mxu0 0.0
    %1561 = vmatpush1.msra.mxu0 0.0
    %1562 = vmatprep.subr.mxu0 0.0
    %1563 = vmatpush1.msra.mxu0 0.0
    %1564 = vmatprep.subr.mxu0 0.0
    %1565 = vmatpush1.msra.mxu0 0.0
    %1566 = vmatprep.subr.mxu0 0.0
    %1567 = vmatpush1.msra.mxu0 0.0
    %1568 = vmatprep.subr.mxu0 0.0
    %1569 = vmatpush1.msra.mxu0 0.0
    %1570 = vmatprep.subr.mxu0 0.0
    %1571 = vmatpush1.msra.mxu0 0.0
    %1572 = vmatprep.subr.mxu0 0.0
    %1573 = vmatpush1.msra.mxu0 0.0
    %1574 = vmatprep.subr.mxu0 0.0
    %1575 = vmatpush1.msra.mxu0 0.0
    %1576 = vmatprep.subr.mxu0 0.0
    %1577 = vmatpush1.msra.mxu0 0.0
    %1578 = vmatprep.subr.mxu0 0.0
    %1579 = vmatpush1.msra.mxu0 0.0
    %1580 = vmatprep.subr.mxu0 0.0
    %1581 = vmatpush1.msra.mxu0 0.0
    %1582 = vmatprep.subr.mxu0 0.0
    %1583 = vmatpush1.msra.mxu0 0.0
    %1584 = vmatprep.subr.mxu0 0.0
    %1585 = vmatpush1.msra.mxu0 0.0
    %1586 = vmatprep.subr.mxu0 0.0
    %1587 = vmatpush1.msra.mxu0 0.0
    %1588 = vmatprep.subr.mxu0 0.0
    %1589 = vmatpush1.msra.mxu0 %v1553
    %1590 = vmatprep.subr.mxu0 0.0
    %1591 = vmatpush2.msra.mxu0 0.0
    %1592 = vmatprep.subr.mxu0 0.0
    %1593 = vmatpush2.msra.mxu0 0.0
    %1594 = vmatprep.subr.mxu0 0.0
    %1595 = vmatpush2.msra.mxu0 0.0
    %1596 = vmatprep.subr.mxu0 0.0
    %1597 = vmatpush2.msra.mxu0 0.0
    %1598 = vmatprep.subr.mxu0 0.0
    %1599 = vmatpush2.msra.mxu0 0.0
    %1600 = vmatprep.subr.mxu0 0.0
    %1601 = vmatpush2.msra.mxu0 0.0
    %1602 = vmatprep.subr.mxu0 0.0
    %1603 = vmatpush2.msra.mxu0 0.0
    %1604 = vmatprep.subr.mxu0 0.0
    %1605 = vmatpush2.msra.mxu0 0.0
    %1606 = vmatprep.subr.mxu0 0.0
    %1607 = vmatpush2.msra.mxu0 0.0
    %1608 = vmatprep.subr.mxu0 0.0
    %1609 = vmatpush2.msra.mxu0 0.0
    %1610 = vmatprep.subr.mxu0 0.0
    %1611 = vmatpush2.msra.mxu0 0.0
    %1612 = vmatprep.subr.mxu0 0.0
    %1613 = vmatpush2.msra.mxu0 0.0
    %1614 = vmatprep.subr.mxu0 0.0
    %1615 = vmatpush2.msra.mxu0 0.0
    %1616 = vmatprep.subr.mxu0 0.0
    %1617 = vmatpush2.msra.mxu0 0.0
    %1618 = vmatprep.subr.mxu0 0.0
    %1619 = vmatpush2.msra.mxu0 0.0
    %1620 = vmatprep.subr.mxu0 0.0
    %1621 = vmatpush2.msra.mxu0 0.0
    %1622 = vmatprep.mubr.f32.mxu0 0.0
    %1623 = vmatmul.mubr.f32.gmra.mxu0 %v1556
    %v1624 = vpop.f32.mrf.mxu0
    %v1625 = vadd.f32 0.0, %v1624
    %v1626 = vpop.f32.mrf.mxu0
    %1627 = vdwg.mxu0
    %1630 = vrot.lane.b32.xlu0 %v1549, 24
    %v1631 = vpop.permute.xlu0 %1630
    %1632 = vrot.lane.b32.xlu0 %v1625, 24
    %v1633 = vpop.permute.xlu0 %1632
    %vm1636 = vcmask 261312
    %1637 = vst.msk [vmem:[#allocation2] sm:$0xff] %vm1636, %v1631
    %1638 = vst.msk [vmem:[#allocation2 + $0x8] sm:$0xff] %vm1636, %v1633
    %v1639 = vld [vmem:[#allocation2] sm:$0xff]
    %v1640 = vld [vmem:[#allocation2 + $0x8] sm:$0xff]
    %v1641 = vld [vmem:[#allocation11] sm:$0xff]
    %v1642 = vld [vmem:[#allocation11 + $0x8] sm:$0xff]
    %v1643 = vld [vmem:[#allocation11 + $0x10] sm:$0xff]
    %v1644 = vld [vmem:[#allocation11 + $0x18] sm:$0xff]
    %v1645 = vld [vmem:[%s7] sm:$0x1]
    %v1647 = vlaneseq
    %v1648 = vshrl.u32 %v1647, 7
    %v1649 = vsub.s32 0, %v1648
    %v1650 = vrot.slane %v1645, %v1649
    %v1653 = vsel %vm111, %v1639, 0
    %v1656 = vsel %vm111, %v1640, 0
    %1658 = vmatprep.subr.mxu0 0.0
    %1659 = vmatpush1.msra.mxu0 0.0
    %1660 = vmatprep.subr.mxu0 0.0
    %1661 = vmatpush1.msra.mxu0 0.0
    %1662 = vmatprep.subr.mxu0 0.0
    %1663 = vmatpush1.msra.mxu0 0.0
    %1664 = vmatprep.subr.mxu0 0.0
    %1665 = vmatpush1.msra.mxu0 0.0
    %1666 = vmatprep.subr.mxu0 0.0
    %1667 = vmatpush1.msra.mxu0 0.0
    %1668 = vmatprep.subr.mxu0 0.0
    %1669 = vmatpush1.msra.mxu0 0.0
    %1670 = vmatprep.subr.mxu0 0.0
    %1671 = vmatpush1.msra.mxu0 0.0
    %1672 = vmatprep.subr.mxu0 0.0
    %1673 = vmatpush1.msra.mxu0 0.0
    %1674 = vmatprep.subr.mxu0 0.0
    %1675 = vmatpush1.msra.mxu0 0.0
    %1676 = vmatprep.subr.mxu0 0.0
    %1677 = vmatpush1.msra.mxu0 0.0
    %1678 = vmatprep.subr.mxu0 0.0
    %1679 = vmatpush1.msra.mxu0 0.0
    %1680 = vmatprep.subr.mxu0 0.0
    %1681 = vmatpush1.msra.mxu0 0.0
    %1682 = vmatprep.subr.mxu0 0.0
    %1683 = vmatpush1.msra.mxu0 %v1644
    %1684 = vmatprep.subr.mxu0 0.0
    %1685 = vmatpush1.msra.mxu0 %v1643
    %1686 = vmatprep.subr.mxu0 0.0
    %1687 = vmatpush1.msra.mxu0 %v1642
    %1688 = vmatprep.subr.mxu0 0.0
    %1689 = vmatpush1.msra.mxu0 %v1641
    %1690 = vmatprep.subr.mxu0 0.0
    %1691 = vmatpush2.msra.mxu0 0.0
    %1692 = vmatprep.subr.mxu0 0.0
    %1693 = vmatpush2.msra.mxu0 0.0
    %1694 = vmatprep.subr.mxu0 0.0
    %1695 = vmatpush2.msra.mxu0 0.0
    %1696 = vmatprep.subr.mxu0 0.0
    %1697 = vmatpush2.msra.mxu0 0.0
    %1698 = vmatprep.subr.mxu0 0.0
    %1699 = vmatpush2.msra.mxu0 0.0
    %1700 = vmatprep.subr.mxu0 0.0
    %1701 = vmatpush2.msra.mxu0 0.0
    %1702 = vmatprep.subr.mxu0 0.0
    %1703 = vmatpush2.msra.mxu0 0.0
    %1704 = vmatprep.subr.mxu0 0.0
    %1705 = vmatpush2.msra.mxu0 0.0
    %1706 = vmatprep.subr.mxu0 0.0
    %1707 = vmatpush2.msra.mxu0 0.0
    %1708 = vmatprep.subr.mxu0 0.0
    %1709 = vmatpush2.msra.mxu0 0.0
    %1710 = vmatprep.subr.mxu0 0.0
    %1711 = vmatpush2.msra.mxu0 0.0
    %1712 = vmatprep.subr.mxu0 0.0
    %1713 = vmatpush2.msra.mxu0 0.0
    %1714 = vmatprep.subr.mxu0 0.0
    %1715 = vmatpush2.msra.mxu0 0.0
    %1716 = vmatprep.subr.mxu0 0.0
    %1717 = vmatpush2.msra.mxu0 0.0
    %1718 = vmatprep.subr.mxu0 0.0
    %1719 = vmatpush2.msra.mxu0 0.0
    %1720 = vmatprep.subr.mxu0 0.0
    %1721 = vmatpush2.msra.mxu0 0.0
    %1722 = vmatprep.mubr.f32.mxu0 0.0
    %1723 = vmatmul.mubr.f32.gmra.mxu0 %v1653
    %v1724 = vpop.f32.mrf.mxu0
    %v1725 = vadd.f32 %v1650, %v1724
    %v1726 = vpop.f32.mrf.mxu0
    %1727 = vmatprep.mubr.f32.mxu0 0.0
    %1728 = vmatmul.mubr.f32.gmra.mxu0 %v1656
    %v1729 = vpop.f32.mrf.mxu0
    %v1730 = vadd.f32 %v1650, %v1729
    %v1731 = vpop.f32.mrf.mxu0
    %1732 = vdwg.mxu0
    %1733 = vst.msk [vmem:[#allocation12] sm:$0xff] %vm111, %v1725
    %1734 = vst.msk [vmem:[#allocation12 + $0x8] sm:$0xff] %vm111, %v1730
    // Predicated region
    $region54: #{tpu_custom_call.1} parent=1 // pred_check
      _
    $region55: #{tpu_custom_call.1} parent=1 // pred_check_branch
      %1736 = sbr.rel (0) target = $region57
    $region56: #{tpu_custom_call.1} parent=1 // pred_region
      %s1738 = ssub.s32 256, 256
      %1739 = vsyncadd [#allocation5], %s1738
      %s1740 = sshll.u32 [#allocation12], 4
      %s1741 = int_to_ptr.vmem [resolvable:$true] %s1740
      %1746 = dma.vmem_to_hbm [thread:$0]  %s1741, 256, %s8, [#allocation5], 128, 128, 8
    $region57: #{tpu_custom_call.1} parent=1 // pred_fallthru
      _
    // Predicated region
    $region58: #{tpu_custom_call.1} parent=1 // pred_check
      _
    $region59: #{tpu_custom_call.1} parent=1 // pred_check_branch
      %1748 = sbr.rel (0) target = $region61
    $region60: #{tpu_custom_call.1} parent=1 // pred_region
      %1749 = dma.done [#allocation5], 256
    $region61: #{tpu_custom_call.1} parent=1 // pred_fallthru
      _
    %1750 = vsyncpa [#allocation4], 1
    %1751 = vsyncpa [#allocation7], 1
    %1752 = vsyncpa [#allocation10], 1
    %1753 = vsyncpa [#allocation5], 1

</llo_original>
